<compile_context>
chip_gen: v7x
topology: tpu7x:2x2x1
jax: 0.10.0
libtpu: 0.0.40
codegen_flags: <defaults>
</compile_context>

<pallas_src>
import math
import numpy as np
import jax
import jax.numpy as jnp
from jax.experimental import pallas as pl
from jax.experimental.pallas import tpu as pltpu

# ----------------------------- model config ---------------------------------
EMB_DIM   = 32          # embedding_dim
NUM_HEADS = 4           # num_heads
HEAD_DIM  = EMB_DIM // NUM_HEADS
FFN_DIM   = EMB_DIM * 2
LN_EPS    = 1e-5
NEG       = -1e30


def _round_up(x, m):
    return (x + m - 1) // m * m


# ------------------------------ Pallas kernel -------------------------------
def _user_embedding_kernel(xu_ref,    # [TB, L*E]      user-packed item embeddings
                           xr_ref,    # [TB*L, E]      row-packed view of the same data
                           len_ref,   # [TB, 1]        true history length per user
                           wkv_ref,   # [L*E, 2*L*E]   bf16 block-diag K|V projection
                           wrow_ref,  # [E+F, L*E+E+F] bf16: [Wq_rep | Wo | W1] / [W2]
                           aux_ref,   # [8, AUXW]      f32 biases / LayerNorm / keypos
                           cst_ref,   # [L*E+H*L, L*E+H*L] bf16 structural 0/1 constants
                           out_ref):  # [TB, E]
    TB, LE = xu_ref.shape
    R, E = xr_ref.shape
    L = LE // E
    H = NUM_HEADS
    HL = H * L
    F = FFN_DIM
    f32, bf16 = jnp.float32, jnp.bfloat16

    # aux row-1 offsets (must match build_param_slabs)
    o_bq = 0
    o_bo = LE
    o_b1 = LE + E
    o_b2 = LE + E + F
    o_lg = LE + 2 * E + F
    o_lb = LE + 3 * E + F
    o_kp = LE + 4 * E + F

    lens = len_ref[...]                                                      # [TB, 1]

    # ---- K/V projection in the per-user packed layout: one bf16 MXU matmul ----
    kv_u = jnp.dot(xu_ref[...].astype(bf16), wkv_ref[...],
                   preferred_element_type=f32) + aux_ref[0:1, 0:2 * LE]      # [TB, 2LE]

    # ---- ONE wide sublane broadcast: each query row sees its user's full K|V ----
    kv_x = jnp.broadcast_to(kv_u[:, None, :], (TB, L, 2 * LE)).reshape(R, 2 * LE)
    k_x = kv_x[:, 0:LE]              # [R, LE]   lane = (key position j, feature e)
    v_x = kv_x[:, LE:2 * LE]         # [R, LE]
    len_x = jnp.broadcast_to(lens[:, None, :], (TB, L, 1)).reshape(R, 1)     # [R, 1]

    # ---- Q projection in row layout: 1/sqrt(head_dim) scale and the L-fold
    #      key-group replication are folded into the weights (no lane ops) ----
    q_rep = jnp.dot(xr_ref[...].astype(bf16), wrow_ref[0:E, 0:LE],
                    preferred_element_type=f32) + aux_ref[1:2, o_bq:o_bq + LE]   # [R, LE]

    # ---- attention scores: full-width VPU product + constant head-pool matmul ----
    prod = q_rep * k_x                                                       # [R, LE] f32
    scores = jnp.dot(prod.astype(bf16), cst_ref[0:LE, 0:HL],
                     preferred_element_type=f32)                             # [R, HL]

    keypos = aux_ref[1:2, o_kp:o_kp + HL]                                    # [1, HL]
    scores = jnp.where(keypos < len_x, scores, NEG)       # key_padding_mask semantics

    # ---- per-head softmax (row-global max is a valid shared stabilizer) ----
    m = jnp.max(scores, axis=-1, keepdims=True)
    ex = jnp.exp(scores - m)
    denom = jnp.dot(ex.astype(bf16), cst_ref[LE:LE + HL, LE:LE + HL],
                    preferred_element_type=f32)            # per-head sums, replicated
    p = ex * pl.reciprocal(denom, approx=True)

    # ---- weighted value sum: scatter p to (j, e) lanes, multiply, pool over keys ----
    p_x = jnp.dot(p.astype(bf16), cst_ref[LE:LE + HL, 0:LE],
                  preferred_element_type=f32)                                # [R, LE]
    ctx = jnp.dot((p_x * v_x).astype(bf16), cst_ref[0:LE, HL:HL + E],
                  preferred_element_type=f32)                                # [R, E]

    # ---- output projection over the concatenated heads ----
    attn = jnp.dot(ctx.astype(bf16), wrow_ref[0:E, LE:LE + E],
                   preferred_element_type=f32) + aux_ref[1:2, o_bo:o_bo + E]  # [R, E]

    # ---- zero padded query rows, sum over sequence, EXACT divide by length ----
    rowpos = jax.lax.broadcasted_iota(jnp.int32, (TB, L, E), 1).reshape(R, E)
    attn = jnp.where(rowpos.astype(f32) < len_x, attn, 0.0)
    summed = jnp.sum(attn.reshape(TB, L, E), axis=1)                         # [TB, E]
    user = summed / (lens + 1e-9)

    # ---- FFN (inference: dropout = identity) + residual + LayerNorm ----
    h1 = jnp.maximum(
        jnp.dot(user.astype(bf16), wrow_ref[0:E, LE + E:LE + E + F],
                preferred_element_type=f32) + aux_ref[1:2, o_b1:o_b1 + F], 0.0)
    ffn = jnp.dot(h1.astype(bf16), wrow_ref[E:E + F, 0:E],
                  preferred_element_type=f32) + aux_ref[1:2, o_b2:o_b2 + E]
    y = user + ffn
    mean = jnp.mean(y, axis=-1, keepdims=True)
    var = jnp.mean((y - mean) ** 2, axis=-1, keepdims=True)
    out_ref[...] = ((y - mean) * jax.lax.rsqrt(var + LN_EPS)
                    * aux_ref[1:2, o_lg:o_lg + E] + aux_ref[1:2, o_lb:o_lb + E])


# --------------------------- parameter slab packing -------------------------
def build_param_slabs(params, L):
    """Pack the 15 parameter tensors into 4 slabs laid out for the kernel."""
    E, H, Dh, F = EMB_DIM, NUM_HEADS, HEAD_DIM, FFN_DIM
    LE, HL = L * E, H * L
    scale = 1.0 / math.sqrt(Dh)

    wq = np.asarray(params["wq_t"], np.float32) * scale
    wk = np.asarray(params["wk_t"], np.float32)
    wv = np.asarray(params["wv_t"], np.float32)
    wo = np.asarray(params["wo_t"], np.float32)
    w1 = np.asarray(params["w1_t"], np.float32)
    w2 = np.asarray(params["w2_t"], np.float32)

    # K|V projection as one block-diagonal matrix acting on the user-packed layout.
    wkv = np.zeros((LE, 2 * LE), np.float32)
    for p in range(L):
        wkv[p * E:(p + 1) * E, p * E:(p + 1) * E] = wk
        wkv[p * E:(p + 1) * E, LE + p * E:LE + (p + 1) * E] = wv

    # Row-layout weights: Wq (pre-scaled, replicated over the L key groups), Wo, W1, W2.
    wrow = np.zeros((E + F, LE + E + F), np.float32)
    wrow[0:E, 0:LE] = np.tile(wq, (1, L))
    wrow[0:E, LE:LE + E] = wo
    wrow[0:E, LE + E:LE + E + F] = w1
    wrow[E:E + F, 0:E] = w2

    # Structural 0/1 constants: score head-pool, probability scatter, value pool, head sums.
    head_of_e = np.arange(E) // Dh
    pool_s = np.zeros((LE, HL), np.float32)      # (j, e)   -> (h, j)
    prep = np.zeros((HL, LE), np.float32)        # (h, j)   -> (j, e)
    for j in range(L):
        for e in range(E):
            h = head_of_e[e]
            pool_s[j * E + e, h * L + j] = 1.0
            prep[h * L + j, j * E + e] = 1.0
    pool_c = np.tile(np.eye(E, dtype=np.float32), (L, 1))           # (j, e) -> e
    head_of_c = np.arange(HL) // L
    blk_ll = (head_of_c[:, None] == head_of_c[None, :]).astype(np.float32)

    cw = LE + HL
    cst = np.zeros((LE + HL, cw), np.float32)
    cst[0:LE, 0:HL] = pool_s
    cst[0:LE, HL:HL + E] = pool_c
    cst[LE:LE + HL, 0:LE] = prep
    cst[LE:LE + HL, LE:LE + HL] = blk_ll

    # Bias / LayerNorm / key-position slab (f32: added to f32 accumulators).
    def vec(name, s=1.0):
        return np.asarray(params[name], np.float32).reshape(-1) * s

    aux_w = max(2 * LE, LE + 4 * E + F + HL)
    aux = np.zeros((8, aux_w), np.float32)
    aux[0, 0:LE] = np.tile(vec("bk"), L)
    aux[0, LE:2 * LE] = np.tile(vec("bv"), L)
    c = 0
    aux[1, c:c + LE] = np.tile(vec("bq", scale), L); c += LE
    aux[1, c:c + E] = vec("bo"); c += E
    aux[1, c:c + F] = vec("b1"); c += F
    aux[1, c:c + E] = vec("b2"); c += E
    aux[1, c:c + E] = vec("ln_g"); c += E
    aux[1, c:c + E] = vec("ln_b"); c += E
    aux[1, c:c + HL] = np.tile(np.arange(L, dtype=np.float32), NUM_HEADS)

    return (jnp.asarray(wkv, jnp.bfloat16), jnp.asarray(wrow, jnp.bfloat16),
            jnp.asarray(aux, jnp.float32), jnp.asarray(cst, jnp.bfloat16))


# ------------------------------ wrapper --------------------------------------
def self_attention_user_embedding(x_pad, lengths, params, *, block_users=128):
    """x_pad: [B, L, E] f32 (zero padded); lengths: [B] ints -> [B, E] f32."""
    B, L, E = x_pad.shape
    assert E == EMB_DIM and E % NUM_HEADS == 0
    LE = L * E

    # Users per grid step.  128 keeps VMEM modest (v7x: 64 MiB/TC) and yields >=2 grid
    # steps for B >= 256 so both TensorCores get work; sweep 64..512 per generation.
    TB = max(8, min(_round_up(block_users, 8), _round_up(B, 8)))
    Bp = _round_up(B, TB)
    n_blocks = Bp // TB

    x_p = x_pad.astype(jnp.float32)
    lens = lengths.astype(jnp.float32).reshape(B, 1)
    if Bp != B:
        # TODO(synk): tail-block pad (one HBM copy); avoidable if the caller pre-pads B.
        x_p = jnp.pad(x_p, ((0, Bp - B), (0, 0), (0, 0)))
        lens = jnp.pad(lens, ((0, Bp - B), (0, 0)))

    # Two FREE (contiguous-merge) views of the same padded buffer.
    x_user = x_p.reshape(Bp, LE)        # per-user packed: lane = (position, feature)
    x_row = x_p.reshape(Bp * L, E)      # per-row packed:  row  = (user, position)

    wkv, wrow, aux, cst = build_param_slabs(params, L)

    out = pl.pallas_call(
        _user_embedding_kernel,
        out_shape=jax.ShapeDtypeStruct((Bp, E), jnp.float32),
        grid=(n_blocks,),
        in_specs=[
            pl.BlockSpec((TB, LE), lambda g: (g, 0)),          # x, user-packed
            pl.BlockSpec((TB * L, E), lambda g: (g, 0)),       # x, row-packed
            pl.BlockSpec((TB, 1), lambda g: (g, 0)),           # lengths
            pl.BlockSpec(wkv.shape, lambda g: (0, 0)),         # block-diag K|V weights
            pl.BlockSpec(wrow.shape, lambda g: (0, 0)),        # Wq_rep / Wo / W1 / W2
            pl.BlockSpec(aux.shape, lambda g: (0, 0)),         # biases / LN / keypos
            pl.BlockSpec(cst.shape, lambda g: (0, 0)),         # structural constants
        ],
        out_specs=pl.BlockSpec((TB, E), lambda g: (g, 0)),
        compiler_params=pltpu.CompilerParams(
            dimension_semantics=("parallel",),
            vmem_limit_bytes=48 * 1024 * 1024,
        ),
    )(x_user, x_row, lens, wkv, wrow, aux, cst)
    return out[:B]


# --------------------------- pure-JAX reference ------------------------------
def reference(x_pad, lengths, params):
    B, L, E = x_pad.shape
    H, Dh = NUM_HEADS, HEAD_DIM
    valid = jnp.arange(L)[None, :] < lengths[:, None]                 # [B, L]

    q = x_pad @ params["wq_t"] + params["bq"]
    k = x_pad @ params["wk_t"] + params["bk"]
    v = x_pad @ params["wv_t"] + params["bv"]
    qh = q.reshape(B, L, H, Dh).transpose(0, 2, 1, 3) / math.sqrt(Dh)
    kh = k.reshape(B, L, H, Dh).transpose(0, 2, 1, 3)
    vh = v.reshape(B, L, H, Dh).transpose(0, 2, 1, 3)
    s = jnp.einsum("bhqd,bhkd->bhqk", qh, kh)
    s = jnp.where(valid[:, None, None, :], s, -jnp.inf)
    p = jax.nn.softmax(s, axis=-1)
    o = jnp.einsum("bhqk,bhkd->bhqd", p, vh).transpose(0, 2, 1, 3).reshape(B, L, E)
    attn = o @ params["wo_t"] + params["bo"]
    attn = attn * valid[..., None]
    user = attn.sum(axis=1) / (lengths[:, None].astype(jnp.float32) + 1e-9)

    h1 = jax.nn.relu(user @ params["w1_t"] + params["b1"])
    y = user + (h1 @ params["w2_t"] + params["b2"])
    mean = y.mean(-1, keepdims=True)
    var = ((y - mean) ** 2).mean(-1, keepdims=True)
    return (y - mean) / jnp.sqrt(var + LN_EPS) * params["ln_g"] + params["ln_b"]


# --------------------------------- main ---------------------------------------
if __name__ == "__main__":
    key = jax.random.PRNGKey(0)
    keys = jax.random.split(key, 16)

    E, F = EMB_DIM, FFN_DIM
    params = {
        "wq_t": 0.1 * jax.random.normal(keys[0], (E, E), jnp.float32),
        "wk_t": 0.1 * jax.random.normal(keys[1], (E, E), jnp.float32),
        "wv_t": 0.1 * jax.random.normal(keys[2], (E, E), jnp.float32),
        "bq":   0.1 * jax.random.normal(keys[3], (1, E), jnp.float32),
        "bk":   0.1 * jax.random.normal(keys[4], (1, E), jnp.float32),
        "bv":   0.1 * jax.random.normal(keys[5], (1, E), jnp.float32),
        "wo_t": 0.1 * jax.random.normal(keys[6], (E, E), jnp.float32),
        "bo":   0.1 * jax.random.normal(keys[7], (1, E), jnp.float32),
        "w1_t": 0.1 * jax.random.normal(keys[8], (E, F), jnp.float32),
        "b1":   0.1 * jax.random.normal(keys[9], (1, F), jnp.float32),
        "w2_t": 0.1 * jax.random.normal(keys[10], (F, E), jnp.float32),
        "b2":   0.1 * jax.random.normal(keys[11], (1, E), jnp.float32),
        "ln_g": 1.0 + 0.1 * jax.random.normal(keys[12], (1, E), jnp.float32),
        "ln_b": 0.1 * jax.random.normal(keys[13], (1, E), jnp.float32),
    }

    # Variable-length user histories (pad_sequence equivalent): B=12 users, max_len L=8.
    B, L = 12, 8
    lengths_np = np.array([5, 8, 3, 1, 7, 8, 2, 6, 4, 8, 3, 5], dtype=np.int32)
    raw = jax.random.normal(keys[14], (B, L, E), jnp.float32)
    pad_mask = (np.arange(L)[None, :] < lengths_np[:, None]).astype(np.float32)
    x_pad = raw * jnp.asarray(pad_mask)[..., None]          # zero padding, like pad_sequence
    lengths = jnp.asarray(lengths_np)

    # block_users=8 -> two grid steps (batch padded 12 -> 16) to exercise the tiling.
    out = self_attention_user_embedding(x_pad, lengths, params, block_users=8)
    out = jax.block_until_ready(out)

    ref = reference(x_pad, lengths, params)
    # Tolerance reflects bf16 weight/matmul operands (review item: bf16 on the MXU);
    # elementwise math, accumulations and the length division stay exact f32.
    np.testing.assert_allclose(np.asarray(out), np.asarray(ref), rtol=3e-2, atol=3e-2)

    print("KERNEL_OK")
</pallas_src>

<mosaic_0001>
module attributes {stable_mosaic.version = 11 : i64} {
  func.func @_user_embedding_kernel(%arg0: i32, %arg1: memref<8x256xf32, #tpu.memory_space<vmem>>, %arg2: memref<64x32xf32, #tpu.memory_space<vmem>>, %arg3: memref<8x1xf32, #tpu.memory_space<vmem>>, %arg4: memref<256x512xbf16, #tpu.memory_space<vmem>>, %arg5: memref<96x352xbf16, #tpu.memory_space<vmem>>, %arg6: memref<8x512xf32, #tpu.memory_space<vmem>>, %arg7: memref<288x288xbf16, #tpu.memory_space<vmem>>, %arg8: memref<8x32xf32, #tpu.memory_space<vmem>>) attributes {dimension_semantics = [#tpu.dimension_semantics<parallel>], iteration_bounds = array<i64: 2>, scalar_prefetch = 0 : i64, scratch_operands = 0 : i64, tpu.core_type = #tpu.core_type<tc>, window_params = [{transform_indices = @transform_0, window_bounds = array<i64: 8, 256>}, {transform_indices = @transform_1, window_bounds = array<i64: 64, 32>}, {transform_indices = @transform_2, window_bounds = array<i64: 8, 1>}, {pipeline_mode = #tpu.pipeline_mode<synchronous>, transform_indices = @transform_3, window_bounds = array<i64: 256, 512>}, {pipeline_mode = #tpu.pipeline_mode<synchronous>, transform_indices = @transform_4, window_bounds = array<i64: 96, 352>}, {pipeline_mode = #tpu.pipeline_mode<synchronous>, transform_indices = @transform_5, window_bounds = array<i64: 8, 512>}, {pipeline_mode = #tpu.pipeline_mode<synchronous>, transform_indices = @transform_6, window_bounds = array<i64: 288, 288>}, {transform_indices = @transform_7, window_bounds = array<i64: 8, 32>}]} {
    %c0 = arith.constant 0 : index
    %c0_0 = arith.constant 0 : index
    %0 = vector.load %arg3[%c0, %c0_0] : memref<8x1xf32, #tpu.memory_space<vmem>>, vector<8x1xf32>
    %c0_1 = arith.constant 0 : index
    %c0_2 = arith.constant 0 : index
    %1 = vector.load %arg1[%c0_1, %c0_2] : memref<8x256xf32, #tpu.memory_space<vmem>>, vector<8x256xf32>
    %2 = arith.truncf %1 : vector<8x256xf32> to vector<8x256xbf16>
    %c0_3 = arith.constant 0 : index
    %c0_4 = arith.constant 0 : index
    %3 = vector.load %arg4[%c0_3, %c0_4] : memref<256x512xbf16, #tpu.memory_space<vmem>>, vector<256x512xbf16>
    %cst = arith.constant dense<0.000000e+00> : vector<8x512xf32>
    %4 = tpu.matmul %2, %3, %cst {dimension_numbers = #tpu.dot_dimension_numbers<[1], [0], [0], [1], [0, 0, 1, 1], [], []>} : vector<8x256xbf16>, vector<256x512xbf16>, vector<8x512xf32> -> vector<8x512xf32>
    %c0_5 = arith.constant 0 : index
    %c0_6 = arith.constant 0 : index
    %5 = vector.load %arg6[%c0_5, %c0_6] : memref<8x512xf32, #tpu.memory_space<vmem>>, vector<1x512xf32>
    %6 = vector.broadcast %5 : vector<1x512xf32> to vector<8x512xf32>
    %7 = arith.addf %4, %6 : vector<8x512xf32>
    %8 = vector.shape_cast %7 : vector<8x512xf32> to vector<8x1x512xf32>
    %9 = vector.shape_cast %8 : vector<8x1x512xf32> to vector<8x1x512xf32>
    %10 = vector.broadcast %9 : vector<8x1x512xf32> to vector<8x8x512xf32>
    %11 = vector.shape_cast %10 : vector<8x8x512xf32> to vector<64x512xf32>
    %12 = vector.extract_strided_slice %11 {offsets = [0, 0], sizes = [64, 256], strides = [1, 1]} : vector<64x512xf32> to vector<64x256xf32>
    %13 = vector.extract_strided_slice %11 {offsets = [0, 256], sizes = [64, 256], strides = [1, 1]} : vector<64x512xf32> to vector<64x256xf32>
    %14 = vector.shape_cast %0 : vector<8x1xf32> to vector<8x1x1xf32>
    %15 = vector.shape_cast %14 : vector<8x1x1xf32> to vector<8x1x1xf32>
    %16 = vector.broadcast %15 : vector<8x1x1xf32> to vector<8x8x1xf32>
    %17 = vector.shape_cast %16 : vector<8x8x1xf32> to vector<64x1xf32>
    %c0_7 = arith.constant 0 : index
    %c0_8 = arith.constant 0 : index
    %18 = vector.load %arg2[%c0_7, %c0_8] : memref<64x32xf32, #tpu.memory_space<vmem>>, vector<64x32xf32>
    %19 = arith.truncf %18 : vector<64x32xf32> to vector<64x32xbf16>
    %c0_9 = arith.constant 0 : index
    %c0_10 = arith.constant 0 : index
    %20 = vector.load %arg5[%c0_9, %c0_10] : memref<96x352xbf16, #tpu.memory_space<vmem>>, vector<32x256xbf16>
    %cst_11 = arith.constant dense<0.000000e+00> : vector<64x256xf32>
    %21 = tpu.matmul %19, %20, %cst_11 {dimension_numbers = #tpu.dot_dimension_numbers<[1], [0], [0], [1], [0, 0, 1, 1], [], []>} : vector<64x32xbf16>, vector<32x256xbf16>, vector<64x256xf32> -> vector<64x256xf32>
    %c1 = arith.constant 1 : index
    %c0_12 = arith.constant 0 : index
    %22 = vector.load %arg6[%c1, %c0_12] : memref<8x512xf32, #tpu.memory_space<vmem>>, vector<1x256xf32>
    %23 = vector.broadcast %22 : vector<1x256xf32> to vector<64x256xf32>
    %24 = arith.addf %21, %23 : vector<64x256xf32>
    %25 = arith.mulf %24, %12 : vector<64x256xf32>
    %26 = arith.truncf %25 : vector<64x256xf32> to vector<64x256xbf16>
    %c0_13 = arith.constant 0 : index
    %c0_14 = arith.constant 0 : index
    %27 = vector.load %arg7[%c0_13, %c0_14] : memref<288x288xbf16, #tpu.memory_space<vmem>>, vector<256x32xbf16>
    %cst_15 = arith.constant dense<0.000000e+00> : vector<64x32xf32>
    %28 = tpu.matmul %26, %27, %cst_15 {dimension_numbers = #tpu.dot_dimension_numbers<[1], [0], [0], [1], [0, 0, 1, 1], [], []>} : vector<64x256xbf16>, vector<256x32xbf16>, vector<64x32xf32> -> vector<64x32xf32>
    %c1_16 = arith.constant 1 : index
    %c448 = arith.constant 448 : index
    %29 = vector.load %arg6[%c1_16, %c448] : memref<8x512xf32, #tpu.memory_space<vmem>>, vector<1x32xf32>
    %30 = vector.broadcast %29 : vector<1x32xf32> to vector<64x32xf32>
    %31 = vector.broadcast %17 : vector<64x1xf32> to vector<64x32xf32>
    %32 = arith.cmpf olt, %30, %31 : vector<64x32xf32>
    %cst_17 = arith.constant -1.000000e+30 : f32
    %33 = vector.broadcast %cst_17 : f32 to vector<64x32xf32>
    %34 = arith.select %32, %28, %33 : vector<64x32xi1>, vector<64x32xf32>
    %cst_18 = arith.constant dense<0xFF800000> : vector<64xf32>
    %35 = vector.multi_reduction <maximumf>, %34, %cst_18 [1] : vector<64x32xf32> to vector<64xf32>
    %36 = vector.shape_cast %35 : vector<64xf32> to vector<64x1xf32>
    %37 = vector.broadcast %36 : vector<64x1xf32> to vector<64x32xf32>
    %38 = arith.subf %34, %37 : vector<64x32xf32>
    %39 = math.exp %38 : vector<64x32xf32>
    %40 = arith.truncf %39 : vector<64x32xf32> to vector<64x32xbf16>
    %c256 = arith.constant 256 : index
    %c256_19 = arith.constant 256 : index
    %41 = vector.load %arg7[%c256, %c256_19] : memref<288x288xbf16, #tpu.memory_space<vmem>>, vector<32x32xbf16>
    %cst_20 = arith.constant dense<0.000000e+00> : vector<64x32xf32>
    %42 = tpu.matmul %40, %41, %cst_20 {dimension_numbers = #tpu.dot_dimension_numbers<[1], [0], [0], [1], [0, 0, 1, 1], [], []>} : vector<64x32xbf16>, vector<32x32xbf16>, vector<64x32xf32> -> vector<64x32xf32>
    %43 = tpu.reciprocal %42 {approx = true} : vector<64x32xf32> -> vector<64x32xf32>
    %44 = arith.mulf %39, %43 : vector<64x32xf32>
    %45 = arith.truncf %44 : vector<64x32xf32> to vector<64x32xbf16>
    %c256_21 = arith.constant 256 : index
    %c0_22 = arith.constant 0 : index
    %46 = vector.load %arg7[%c256_21, %c0_22] : memref<288x288xbf16, #tpu.memory_space<vmem>>, vector<32x256xbf16>
    %cst_23 = arith.constant dense<0.000000e+00> : vector<64x256xf32>
    %47 = tpu.matmul %45, %46, %cst_23 {dimension_numbers = #tpu.dot_dimension_numbers<[1], [0], [0], [1], [0, 0, 1, 1], [], []>} : vector<64x32xbf16>, vector<32x256xbf16>, vector<64x256xf32> -> vector<64x256xf32>
    %48 = arith.mulf %47, %13 : vector<64x256xf32>
    %49 = arith.truncf %48 : vector<64x256xf32> to vector<64x256xbf16>
    %c0_24 = arith.constant 0 : index
    %c32 = arith.constant 32 : index
    %50 = vector.load %arg7[%c0_24, %c32] : memref<288x288xbf16, #tpu.memory_space<vmem>>, vector<256x32xbf16>
    %cst_25 = arith.constant dense<0.000000e+00> : vector<64x32xf32>
    %51 = tpu.matmul %49, %50, %cst_25 {dimension_numbers = #tpu.dot_dimension_numbers<[1], [0], [0], [1], [0, 0, 1, 1], [], []>} : vector<64x256xbf16>, vector<256x32xbf16>, vector<64x32xf32> -> vector<64x32xf32>
    %52 = arith.truncf %51 : vector<64x32xf32> to vector<64x32xbf16>
    %c0_26 = arith.constant 0 : index
    %c256_27 = arith.constant 256 : index
    %53 = vector.load %arg5[%c0_26, %c256_27] : memref<96x352xbf16, #tpu.memory_space<vmem>>, vector<32x32xbf16>
    %cst_28 = arith.constant dense<0.000000e+00> : vector<64x32xf32>
    %54 = tpu.matmul %52, %53, %cst_28 {dimension_numbers = #tpu.dot_dimension_numbers<[1], [0], [0], [1], [0, 0, 1, 1], [], []>} : vector<64x32xbf16>, vector<32x32xbf16>, vector<64x32xf32> -> vector<64x32xf32>
    %c1_29 = arith.constant 1 : index
    %c256_30 = arith.constant 256 : index
    %55 = vector.load %arg6[%c1_29, %c256_30] : memref<8x512xf32, #tpu.memory_space<vmem>>, vector<1x32xf32>
    %56 = vector.broadcast %55 : vector<1x32xf32> to vector<64x32xf32>
    %57 = arith.addf %54, %56 : vector<64x32xf32>
    %58 = tpu.iota {dimensions = array<i32: 1>} : vector<8x8x32xi32>
    %59 = vector.shape_cast %58 : vector<8x8x32xi32> to vector<64x32xi32>
    %60 = arith.sitofp %59 : vector<64x32xi32> to vector<64x32xf32>
    %61 = vector.broadcast %17 : vector<64x1xf32> to vector<64x32xf32>
    %62 = arith.cmpf olt, %60, %61 : vector<64x32xf32>
    %cst_31 = arith.constant 0.000000e+00 : f32
    %63 = vector.broadcast %cst_31 : f32 to vector<64x32xf32>
    %64 = arith.select %62, %57, %63 : vector<64x32xi1>, vector<64x32xf32>
    %65 = vector.shape_cast %64 : vector<64x32xf32> to vector<8x8x32xf32>
    %cst_32 = arith.constant dense<0.000000e+00> : vector<8x32xf32>
    %66 = vector.multi_reduction <add>, %65, %cst_32 [1] : vector<8x8x32xf32> to vector<8x32xf32>
    %cst_33 = arith.constant 9.99999971E-10 : f32
    %67 = vector.broadcast %cst_33 : f32 to vector<8x1xf32>
    %68 = arith.addf %0, %67 : vector<8x1xf32>
    %69 = vector.broadcast %68 : vector<8x1xf32> to vector<8x32xf32>
    %70 = arith.divf %66, %69 : vector<8x32xf32>
    %71 = arith.truncf %70 : vector<8x32xf32> to vector<8x32xbf16>
    %c0_34 = arith.constant 0 : index
    %c288 = arith.constant 288 : index
    %72 = vector.load %arg5[%c0_34, %c288] : memref<96x352xbf16, #tpu.memory_space<vmem>>, vector<32x64xbf16>
    %cst_35 = arith.constant dense<0.000000e+00> : vector<8x64xf32>
    %73 = tpu.matmul %71, %72, %cst_35 {dimension_numbers = #tpu.dot_dimension_numbers<[1], [0], [0], [1], [0, 0, 1, 1], [], []>} : vector<8x32xbf16>, vector<32x64xbf16>, vector<8x64xf32> -> vector<8x64xf32>
    %c1_36 = arith.constant 1 : index
    %c288_37 = arith.constant 288 : index
    %74 = vector.load %arg6[%c1_36, %c288_37] : memref<8x512xf32, #tpu.memory_space<vmem>>, vector<1x64xf32>
    %75 = vector.broadcast %74 : vector<1x64xf32> to vector<8x64xf32>
    %76 = arith.addf %73, %75 : vector<8x64xf32>
    %cst_38 = arith.constant 0.000000e+00 : f32
    %77 = vector.broadcast %cst_38 : f32 to vector<8x64xf32>
    %78 = arith.maximumf %76, %77 : vector<8x64xf32>
    %79 = arith.truncf %78 : vector<8x64xf32> to vector<8x64xbf16>
    %c32_39 = arith.constant 32 : index
    %c0_40 = arith.constant 0 : index
    %80 = vector.load %arg5[%c32_39, %c0_40] : memref<96x352xbf16, #tpu.memory_space<vmem>>, vector<64x32xbf16>
    %cst_41 = arith.constant dense<0.000000e+00> : vector<8x32xf32>
    %81 = tpu.matmul %79, %80, %cst_41 {dimension_numbers = #tpu.dot_dimension_numbers<[1], [0], [0], [1], [0, 0, 1, 1], [], []>} : vector<8x64xbf16>, vector<64x32xbf16>, vector<8x32xf32> -> vector<8x32xf32>
    %c1_42 = arith.constant 1 : index
    %c352 = arith.constant 352 : index
    %82 = vector.load %arg6[%c1_42, %c352] : memref<8x512xf32, #tpu.memory_space<vmem>>, vector<1x32xf32>
    %83 = vector.broadcast %82 : vector<1x32xf32> to vector<8x32xf32>
    %84 = arith.addf %81, %83 : vector<8x32xf32>
    %85 = arith.addf %70, %84 : vector<8x32xf32>
    %cst_43 = arith.constant dense<0.000000e+00> : vector<8xf32>
    %86 = vector.multi_reduction <add>, %85, %cst_43 [1] : vector<8x32xf32> to vector<8xf32>
    %87 = vector.shape_cast %86 : vector<8xf32> to vector<8x1xf32>
    %cst_44 = arith.constant 3.200000e+01 : f32
    %88 = vector.broadcast %cst_44 : f32 to vector<8x1xf32>
    %89 = arith.divf %87, %88 : vector<8x1xf32>
    %90 = vector.broadcast %89 : vector<8x1xf32> to vector<8x32xf32>
    %91 = arith.subf %85, %90 : vector<8x32xf32>
    %92 = arith.mulf %91, %91 : vector<8x32xf32>
    %cst_45 = arith.constant dense<0.000000e+00> : vector<8xf32>
    %93 = vector.multi_reduction <add>, %92, %cst_45 [1] : vector<8x32xf32> to vector<8xf32>
    %94 = vector.shape_cast %93 : vector<8xf32> to vector<8x1xf32>
    %cst_46 = arith.constant 3.200000e+01 : f32
    %95 = vector.broadcast %cst_46 : f32 to vector<8x1xf32>
    %96 = arith.divf %94, %95 : vector<8x1xf32>
    %97 = vector.broadcast %89 : vector<8x1xf32> to vector<8x32xf32>
    %98 = arith.subf %85, %97 : vector<8x32xf32>
    %cst_47 = arith.constant 9.99999974E-6 : f32
    %99 = vector.broadcast %cst_47 : f32 to vector<8x1xf32>
    %100 = arith.addf %96, %99 : vector<8x1xf32>
    %101 = math.rsqrt %100 : vector<8x1xf32>
    %102 = vector.broadcast %101 : vector<8x1xf32> to vector<8x32xf32>
    %103 = arith.mulf %98, %102 : vector<8x32xf32>
    %c1_48 = arith.constant 1 : index
    %c384 = arith.constant 384 : index
    %104 = vector.load %arg6[%c1_48, %c384] : memref<8x512xf32, #tpu.memory_space<vmem>>, vector<1x32xf32>
    %105 = vector.broadcast %104 : vector<1x32xf32> to vector<8x32xf32>
    %106 = arith.mulf %103, %105 : vector<8x32xf32>
    %c1_49 = arith.constant 1 : index
    %c416 = arith.constant 416 : index
    %107 = vector.load %arg6[%c1_49, %c416] : memref<8x512xf32, #tpu.memory_space<vmem>>, vector<1x32xf32>
    %108 = vector.broadcast %107 : vector<1x32xf32> to vector<8x32xf32>
    %109 = arith.addf %106, %108 : vector<8x32xf32>
    %c0_50 = arith.constant 0 : index
    %c0_51 = arith.constant 0 : index
    %110 = vector.load %arg8[%c0_50, %c0_51] : memref<8x32xf32, #tpu.memory_space<vmem>>, vector<8x32xf32>
    tpu.vector_store %arg8[%c0_50, %c0_51], %109 {strides = array<i32>} : memref<8x32xf32, #tpu.memory_space<vmem>>, vector<8x32xf32>,
    return
  }
  func.func @transform_0(%arg0: i32) -> (i32, i32) {
    %c0_i32 = arith.constant 0 : i32
    %c0_i32_0 = arith.constant 0 : i32
    return %arg0, %c0_i32 : i32, i32
  }
  func.func @transform_1(%arg0: i32) -> (i32, i32) {
    %c0_i32 = arith.constant 0 : i32
    %c0_i32_0 = arith.constant 0 : i32
    return %arg0, %c0_i32 : i32, i32
  }
  func.func @transform_2(%arg0: i32) -> (i32, i32) {
    %c0_i32 = arith.constant 0 : i32
    %c0_i32_0 = arith.constant 0 : i32
    return %arg0, %c0_i32 : i32, i32
  }
  func.func @transform_3(%arg0: i32) -> (i32, i32) {
    %c0_i32 = arith.constant 0 : i32
    %c0_i32_0 = arith.constant 0 : i32
    %c0_i32_1 = arith.constant 0 : i32
    return %c0_i32, %c0_i32_0 : i32, i32
  }
  func.func @transform_4(%arg0: i32) -> (i32, i32) {
    %c0_i32 = arith.constant 0 : i32
    %c0_i32_0 = arith.constant 0 : i32
    %c0_i32_1 = arith.constant 0 : i32
    return %c0_i32, %c0_i32_0 : i32, i32
  }
  func.func @transform_5(%arg0: i32) -> (i32, i32) {
    %c0_i32 = arith.constant 0 : i32
    %c0_i32_0 = arith.constant 0 : i32
    %c0_i32_1 = arith.constant 0 : i32
    return %c0_i32, %c0_i32_0 : i32, i32
  }
  func.func @transform_6(%arg0: i32) -> (i32, i32) {
    %c0_i32 = arith.constant 0 : i32
    %c0_i32_0 = arith.constant 0 : i32
    %c0_i32_1 = arith.constant 0 : i32
    return %c0_i32, %c0_i32_0 : i32, i32
  }
  func.func @transform_7(%arg0: i32) -> (i32, i32) {
    %c0_i32 = arith.constant 0 : i32
    %c0_i32_0 = arith.constant 0 : i32
    return %arg0, %c0_i32 : i32, i32
  }
}

</mosaic_0001>

<llo_original>
// kernel: tpu_custom_call.1
$region0: #{tpu_custom_call.1}
  #allocation0 [shape = 'u32[]', space=smem, size = 0x4, offset = 0x4, fixed_abs, tag = 'smem constant byte address 0x4 - core index']
  #allocation1 [shape = 'u32[144,128]{1,0:T(1,128)}', space=vmem, size = 0x12000, scoped, tag = 'internal scratch']
  %s0 = inlined_call_operand.vmem [shape: f32[16,256], index: 0, kind: input, shape index: {}]
  %s1 = inlined_call_operand.vmem [shape: f32[128,32], index: 1, kind: input, shape index: {}]
  %s2 = inlined_call_operand.vmem [shape: f32[16,1], index: 2, kind: input, shape index: {}]
  %s3 = inlined_call_operand.hbm [shape: bf16[256,512], index: 3, kind: input, shape index: {}]
  %s4 = inlined_call_operand.vmem [shape: bf16[96,352], index: 4, kind: input, shape index: {}]
  %s5 = inlined_call_operand.hbm [shape: f32[8,512], index: 5, kind: input, shape index: {}]
  %s6 = inlined_call_operand.hbm [shape: bf16[288,288], index: 6, kind: input, shape index: {}]
  %s7 = inlined_call_operand.hbm [shape: f32[16,32], index: 7, kind: output, shape index: {}]
  %s8 = sld [smem:[#allocation0]]
  $region73: #{tpu_custom_call.1} parent=0
    _
  %s10 = ssub.s32 1, %s8
  %s11 = scalar_select 0, %s10, %s8
  $region1: #{tpu_custom_call.1} parent=0
    #allocation2 [shape = 'u8[262144]{0}', space=vmem, size = 0x40000, scoped, tag = 'input window, operand 3, single buffered']
    #allocation3 [shape = 's32[2]{0}', space=sflag, size = 0x8, scoped, tag = 'scoped memory for tpu_custom_call.1']
    #allocation4 [shape = 's32[2]{0}', space=sflag, size = 0x8, scoped, tag = 'scoped memory for tpu_custom_call.1']
    #allocation5 [shape = 'u8[16384]{0}', space=vmem, size = 0x4000, scoped, tag = 'input window, operand 5, single buffered']
    #allocation6 [shape = 's32[1]{0}', space=sflag, size = 0x4, scoped, tag = 'scoped memory for tpu_custom_call.1']
    #allocation7 [shape = 'u8[221184]{0}', space=vmem, size = 0x36000, scoped, tag = 'input window, operand 6, single buffered']
    #allocation8 [shape = 'u8[8192]{0}', space=vmem, size = 0x2000, scoped, tag = 'output window, operand 0']
    %12 = vsyncpa [#allocation3], 0
    %13 = vsyncpa [#allocation6], 0
    %14 = vsyncpa [#allocation4], 0
    %s15 = scalar_lea.sflag [#allocation4], 1
    %16 = vsyncpa %s15, 0
    loop: start=0, step=1, limit=4
    $region2: #{tpu_custom_call.1} parent=1 // loop_pre_header
      _
    $region3: #{tpu_custom_call.1} parent=1 // loop_header
      %s18 = sphi 0, %s22
      %p19 = scmp.ge.s32.totalorder %s18, 4
      %s28 = sphi 0, %s30
      %s31 = sphi 0, %s28
      %s32 = sphi 0, %s31
      %s48 = sphi 0, %s32
      %s54 = sphi 0, %s56
      %s57 = sphi 0, %s54
      %s58 = sphi 0, %s57
      %s74 = sphi 0, %s58
      %s80 = sphi 0, %s82
      %s83 = sphi 0, %s80
      %s84 = sphi 0, %s83
      %s100 = sphi 0, %s84
      %s104 = sphi 0, %s104
      %s106 = sphi 0, %s104
      %s107 = sphi 0, %s106
      %s121 = sphi 0, %s107
      %s125 = sphi 0, %s125
      %s127 = sphi 0, %s125
      %s128 = sphi 0, %s127
      %s142 = sphi 0, %s128
      %s146 = sphi 0, %s146
      %s148 = sphi 0, %s146
      %s149 = sphi 0, %s148
      %s163 = sphi 0, %s149
      %s167 = sphi 0, %s167
      %s169 = sphi 0, %s167
      %s170 = sphi 0, %s169
      %s184 = sphi 0, %s170
      %s190 = sphi 0, %s192
      %s193 = sphi 0, %s190
      %s194 = sphi 0, %s193
      %s210 = sphi 0, %s194
    $region4: #{tpu_custom_call.1} parent=1 // loop_header_branch
      %21 = sbr.rel (%p19) target = $region8
    $region5: #{tpu_custom_call.1} parent=1 // loop_body
      %s23 = ssub.s32 %s18, 1
      %s24 = ssub.s32 %s18, 2
      %s25 = sadd.s32 %s18, 1
      %s26 = ssub.s32 %s18, %s25
      %p27 = scmp.eq.s32.totalorder %s26, 0
      %s29 = sadd.s32 %s28, 1
      %s30 = scalar_select %p27, %s28, %s29
      %p33 = pneg %p27
      %p34 = scmp.eq.s32.totalorder %s18, 1
      %p35 = por %p33, %p34
      %p36 = scmp.ne.s32.totalorder %s28, %s31
      %p37 = scmp.eq.s32.totalorder %s18, 0
      %p38 = por %p36, %p37
      %p39 = scmp.ne.s32.totalorder %s28, %s31
      %p40 = scmp.eq.s32.totalorder %s23, 1
      %p41 = por %p39, %p40
      %p42 = scmp.ne.s32.totalorder %s31, %s32
      %p43 = scmp.eq.s32.totalorder %s23, 0
      %p44 = por %p42, %p43
      %p45 = scmp.ne.s32.totalorder %s31, %s32
      %p46 = scmp.eq.s32.totalorder %s24, 1
      %p47 = por %p45, %p46
      %p49 = scmp.ne.s32.totalorder %s32, %s48
      %p50 = scmp.eq.s32.totalorder %s24, 0
      %p51 = por %p49, %p50
      %s52 = ssub.s32 %s18, %s25
      %p53 = scmp.eq.s32.totalorder %s52, 0
      %s55 = sadd.s32 %s54, 1
      %s56 = scalar_select %p53, %s54, %s55
      %p59 = pneg %p53
      %p60 = scmp.eq.s32.totalorder %s18, 1
      %p61 = por %p59, %p60
      %p62 = scmp.ne.s32.totalorder %s54, %s57
      %p63 = scmp.eq.s32.totalorder %s18, 0
      %p64 = por %p62, %p63
      %p65 = scmp.ne.s32.totalorder %s54, %s57
      %p66 = scmp.eq.s32.totalorder %s23, 1
      %p67 = por %p65, %p66
      %p68 = scmp.ne.s32.totalorder %s57, %s58
      %p69 = scmp.eq.s32.totalorder %s23, 0
      %p70 = por %p68, %p69
      %p71 = scmp.ne.s32.totalorder %s57, %s58
      %p72 = scmp.eq.s32.totalorder %s24, 1
      %p73 = por %p71, %p72
      %p75 = scmp.ne.s32.totalorder %s58, %s74
      %p76 = scmp.eq.s32.totalorder %s24, 0
      %p77 = por %p75, %p76
      %s78 = ssub.s32 %s18, %s25
      %p79 = scmp.eq.s32.totalorder %s78, 0
      %s81 = sadd.s32 %s80, 1
      %s82 = scalar_select %p79, %s80, %s81
      %p85 = pneg %p79
      %p86 = scmp.eq.s32.totalorder %s18, 1
      %p87 = por %p85, %p86
      %p88 = scmp.ne.s32.totalorder %s80, %s83
      %p89 = scmp.eq.s32.totalorder %s18, 0
      %p90 = por %p88, %p89
      %p91 = scmp.ne.s32.totalorder %s80, %s83
      %p92 = scmp.eq.s32.totalorder %s23, 1
      %p93 = por %p91, %p92
      %p94 = scmp.ne.s32.totalorder %s83, %s84
      %p95 = scmp.eq.s32.totalorder %s23, 0
      %p96 = por %p94, %p95
      %p97 = scmp.ne.s32.totalorder %s83, %s84
      %p98 = scmp.eq.s32.totalorder %s24, 1
      %p99 = por %p97, %p98
      %p101 = scmp.ne.s32.totalorder %s84, %s100
      %p102 = scmp.eq.s32.totalorder %s24, 0
      %p103 = por %p101, %p102
      %s105 = sadd.s32 %s104, 1
      %p108 = scmp.eq.s32.totalorder %s18, 1
      %p109 = scmp.ne.s32.totalorder %s104, %s106
      %p110 = scmp.eq.s32.totalorder %s18, 0
      %p111 = por %p109, %p110
      %p112 = scmp.ne.s32.totalorder %s104, %s106
      %p113 = scmp.eq.s32.totalorder %s23, 1
      %p114 = por %p112, %p113
      %p115 = scmp.ne.s32.totalorder %s106, %s107
      %p116 = scmp.eq.s32.totalorder %s23, 0
      %p117 = por %p115, %p116
      %p118 = scmp.ne.s32.totalorder %s106, %s107
      %p119 = scmp.eq.s32.totalorder %s24, 1
      %p120 = por %p118, %p119
      %p122 = scmp.ne.s32.totalorder %s107, %s121
      %p123 = scmp.eq.s32.totalorder %s24, 0
      %p124 = por %p122, %p123
      %s126 = sadd.s32 %s125, 1
      %p129 = scmp.eq.s32.totalorder %s18, 1
      %p130 = scmp.ne.s32.totalorder %s125, %s127
      %p131 = scmp.eq.s32.totalorder %s18, 0
      %p132 = por %p130, %p131
      %p133 = scmp.ne.s32.totalorder %s125, %s127
      %p134 = scmp.eq.s32.totalorder %s23, 1
      %p135 = por %p133, %p134
      %p136 = scmp.ne.s32.totalorder %s127, %s128
      %p137 = scmp.eq.s32.totalorder %s23, 0
      %p138 = por %p136, %p137
      %p139 = scmp.ne.s32.totalorder %s127, %s128
      %p140 = scmp.eq.s32.totalorder %s24, 1
      %p141 = por %p139, %p140
      %p143 = scmp.ne.s32.totalorder %s128, %s142
      %p144 = scmp.eq.s32.totalorder %s24, 0
      %p145 = por %p143, %p144
      %s147 = sadd.s32 %s146, 1
      %p150 = scmp.eq.s32.totalorder %s18, 1
      %p151 = scmp.ne.s32.totalorder %s146, %s148
      %p152 = scmp.eq.s32.totalorder %s18, 0
      %p153 = por %p151, %p152
      %p154 = scmp.ne.s32.totalorder %s146, %s148
      %p155 = scmp.eq.s32.totalorder %s23, 1
      %p156 = por %p154, %p155
      %p157 = scmp.ne.s32.totalorder %s148, %s149
      %p158 = scmp.eq.s32.totalorder %s23, 0
      %p159 = por %p157, %p158
      %p160 = scmp.ne.s32.totalorder %s148, %s149
      %p161 = scmp.eq.s32.totalorder %s24, 1
      %p162 = por %p160, %p161
      %p164 = scmp.ne.s32.totalorder %s149, %s163
      %p165 = scmp.eq.s32.totalorder %s24, 0
      %p166 = por %p164, %p165
      %s168 = sadd.s32 %s167, 1
      %p171 = scmp.eq.s32.totalorder %s18, 1
      %p172 = scmp.ne.s32.totalorder %s167, %s169
      %p173 = scmp.eq.s32.totalorder %s18, 0
      %p174 = por %p172, %p173
      %p175 = scmp.ne.s32.totalorder %s167, %s169
      %p176 = scmp.eq.s32.totalorder %s23, 1
      %p177 = por %p175, %p176
      %p178 = scmp.ne.s32.totalorder %s169, %s170
      %p179 = scmp.eq.s32.totalorder %s23, 0
      %p180 = por %p178, %p179
      %p181 = scmp.ne.s32.totalorder %s169, %s170
      %p182 = scmp.eq.s32.totalorder %s24, 1
      %p183 = por %p181, %p182
      %p185 = scmp.ne.s32.totalorder %s170, %s184
      %p186 = scmp.eq.s32.totalorder %s24, 0
      %p187 = por %p185, %p186
      %s188 = ssub.s32 %s18, %s25
      %p189 = scmp.eq.s32.totalorder %s188, 0
      %s191 = sadd.s32 %s190, 1
      %s192 = scalar_select %p189, %s190, %s191
      %p195 = pneg %p189
      %p196 = scmp.eq.s32.totalorder %s18, 1
      %p197 = por %p195, %p196
      %p198 = scmp.ne.s32.totalorder %s190, %s193
      %p199 = scmp.eq.s32.totalorder %s18, 0
      %p200 = por %p198, %p199
      %p201 = scmp.ne.s32.totalorder %s190, %s193
      %p202 = scmp.eq.s32.totalorder %s23, 1
      %p203 = por %p201, %p202
      %p204 = scmp.ne.s32.totalorder %s193, %s194
      %p205 = scmp.eq.s32.totalorder %s23, 0
      %p206 = por %p204, %p205
      %p207 = scmp.ne.s32.totalorder %s193, %s194
      %p208 = scmp.eq.s32.totalorder %s24, 1
      %p209 = por %p207, %p208
      %p211 = scmp.ne.s32.totalorder %s194, %s210
      %p212 = scmp.eq.s32.totalorder %s24, 0
      %p213 = por %p211, %p212
      %p214 = scmp.le.s32.totalorder 1, %s18
      %p215 = scmp.lt.s32.totalorder %s18, 3
      %p216 = pnand %p214, %p215
      %p217 = pneg %p216
      // Predicated region
      $region9: #{tpu_custom_call.1} parent=5 // pred_check
        _
      $region10: #{tpu_custom_call.1} parent=5 // pred_check_branch
        %219 = sbr.rel (%p216) target = $region12
      $region11: #{tpu_custom_call.1} parent=5 // pred_region
        %s220 = ssub.s32 %s18, 1
        // Predicated region
        $region13: #{tpu_custom_call.1} parent=11 // pred_check
          %p221 = pneg %p117
        $region14: #{tpu_custom_call.1} parent=11 // pred_check_branch
          %223 = sbr.rel (%p221) target = $region16
        $region15: #{tpu_custom_call.1} parent=11 // pred_region
          %s225 = ssub.s32 8192, 8192
          %226 = vsyncadd [#allocation3], %s225
          %s227 = sshll.u32 [#allocation2], 4
          %s228 = int_to_ptr.vmem [resolvable:$true] %s227
          %233 = dma.hbm_to_vmem [thread:$0]  %s3, 8192, %s228, [#allocation3], 256, 256, 16
        $region16: #{tpu_custom_call.1} parent=11 // pred_fallthru
          _
        // Predicated region
        $region17: #{tpu_custom_call.1} parent=11 // pred_check
          %p234 = pneg %p138
        $region18: #{tpu_custom_call.1} parent=11 // pred_check_branch
          %236 = sbr.rel (%p234) target = $region20
        $region19: #{tpu_custom_call.1} parent=11 // pred_region
          _
        $region20: #{tpu_custom_call.1} parent=11 // pred_fallthru
          _
        // Predicated region
        $region21: #{tpu_custom_call.1} parent=11 // pred_check
          %p237 = pneg %p159
        $region22: #{tpu_custom_call.1} parent=11 // pred_check_branch
          %239 = sbr.rel (%p237) target = $region24
        $region23: #{tpu_custom_call.1} parent=11 // pred_region
          %s241 = ssub.s32 512, 512
          %242 = vsyncadd [#allocation6], %s241
          %s244 = sshll.u32 [#allocation5], 4
          %s245 = int_to_ptr.vmem [resolvable:$true] %s244
          %247 = dma.hbm_to_vmem [thread:$0]  %s5, 512, %s245, [#allocation6]
        $region24: #{tpu_custom_call.1} parent=11 // pred_fallthru
          _
        // Predicated region
        $region25: #{tpu_custom_call.1} parent=11 // pred_check
          %p248 = pneg %p180
        $region26: #{tpu_custom_call.1} parent=11 // pred_check_branch
          %250 = sbr.rel (%p248) target = $region28
        $region27: #{tpu_custom_call.1} parent=11 // pred_region
          %s252 = ssub.s32 6912, 6912
          %253 = vsyncadd [#allocation6], %s252
          %s254 = sshll.u32 [#allocation7], 4
          %s255 = int_to_ptr.vmem [resolvable:$true] %s254
          %260 = dma.hbm_to_vmem [thread:$0]  %s6, 6912, %s255, [#allocation6], 192, 192, 12
        $region28: #{tpu_custom_call.1} parent=11 // pred_fallthru
          _
      $region12: #{tpu_custom_call.1} parent=5 // pred_fallthru
        _
      %p261 = scmp.lt.s32.totalorder %s18, 2
      // Predicated region
      $region29: #{tpu_custom_call.1} parent=5 // pred_check
        %p262 = pneg %p261
      $region30: #{tpu_custom_call.1} parent=5 // pred_check_branch
        %264 = sbr.rel (%p262) target = $region32
      $region31: #{tpu_custom_call.1} parent=5 // pred_region
        // Predicated region
        $region33: #{tpu_custom_call.1} parent=31 // pred_check
          %p265 = pneg %p38
        $region34: #{tpu_custom_call.1} parent=31 // pred_check_branch
          %267 = sbr.rel (%p265) target = $region36
        $region35: #{tpu_custom_call.1} parent=31 // pred_region
          %p268 = scmp.lt.s32.totalorder %s18, 1
          %s269 = scalar_select %p268, %s18, 1
          %s270 = smul.addr %s269, 2
          %s271 = smul.addr %s270, 8
          %s272 = scalar_lea.vmem %s0, %s271
        $region36: #{tpu_custom_call.1} parent=31 // pred_fallthru
          _
        // Predicated region
        $region37: #{tpu_custom_call.1} parent=31 // pred_check
          %p273 = pneg %p64
        $region38: #{tpu_custom_call.1} parent=31 // pred_check_branch
          %275 = sbr.rel (%p273) target = $region40
        $region39: #{tpu_custom_call.1} parent=31 // pred_region
          %s276 = smul.u32 8, %s18
          %p277 = scmp.lt.s32.totalorder %s276, 15
          %s278 = scalar_select %p277, %s276, 15
          %s279 = smul.addr %s278, 8
          %s280 = scalar_lea.vmem %s1, %s279
          %s281 = smul.u32 8, %s18
        $region40: #{tpu_custom_call.1} parent=31 // pred_fallthru
          _
        // Predicated region
        $region41: #{tpu_custom_call.1} parent=31 // pred_check
          %p282 = pneg %p90
        $region42: #{tpu_custom_call.1} parent=31 // pred_check_branch
          %284 = sbr.rel (%p282) target = $region44
        $region43: #{tpu_custom_call.1} parent=31 // pred_region
          %p285 = scmp.lt.s32.totalorder %s18, 1
          %s286 = scalar_select %p285, %s18, 1
          %s287 = smul.addr %s286, 8
          %s288 = scalar_lea.vmem %s2, %s287
        $region44: #{tpu_custom_call.1} parent=31 // pred_fallthru
          _
      $region32: #{tpu_custom_call.1} parent=5 // pred_fallthru
        _
      %p289 = scmp.le.s32.totalorder 1, %s18
      %p290 = scmp.lt.s32.totalorder %s18, 3
      %p291 = pnand %p289, %p290
      %p292 = pneg %p291
      // Predicated region
      $region45: #{tpu_custom_call.1} parent=5 // pred_check
        _
      $region46: #{tpu_custom_call.1} parent=5 // pred_check_branch
        %294 = sbr.rel (%p291) target = $region48
      $region47: #{tpu_custom_call.1} parent=5 // pred_region
        %s295 = ssub.s32 %s18, 1
        // Predicated region
        $region49: #{tpu_custom_call.1} parent=47 // pred_check
          %p296 = pneg %p117
        $region50: #{tpu_custom_call.1} parent=47 // pred_check_branch
          %298 = sbr.rel (%p296) target = $region52
        $region51: #{tpu_custom_call.1} parent=47 // pred_region
          %299 = dma.done [#allocation3], 8192
        $region52: #{tpu_custom_call.1} parent=47 // pred_fallthru
          _
        // Predicated region
        $region53: #{tpu_custom_call.1} parent=47 // pred_check
          %p300 = pneg %p159
        $region54: #{tpu_custom_call.1} parent=47 // pred_check_branch
          %302 = sbr.rel (%p300) target = $region56
        $region55: #{tpu_custom_call.1} parent=47 // pred_region
          %303 = dma.done [#allocation6], 512
        $region56: #{tpu_custom_call.1} parent=47 // pred_fallthru
          _
        // Predicated region
        $region57: #{tpu_custom_call.1} parent=47 // pred_check
          %p304 = pneg %p180
        $region58: #{tpu_custom_call.1} parent=47 // pred_check_branch
          %306 = sbr.rel (%p304) target = $region60
        $region59: #{tpu_custom_call.1} parent=47 // pred_region
          %307 = dma.done [#allocation6], 6912
        $region60: #{tpu_custom_call.1} parent=47 // pred_fallthru
          _
        %p308 = scmp.lt.s32.totalorder %s23, 1
        %s309 = scalar_select %p308, %s23, 1
        %s310 = smul.addr %s309, 2
        %s311 = smul.addr %s310, 8
        %s312 = scalar_lea.vmem %s0, %s311
        %p313 = pneg %p44
        %p314 = pneg %p41
        %s315 = smul.u32 8, %s23
        %p316 = scmp.lt.s32.totalorder %s315, 15
        %s317 = scalar_select %p316, %s315, 15
        %s318 = smul.addr %s317, 8
        %s319 = scalar_lea.vmem %s1, %s318
        %p320 = pneg %p70
        %p321 = pneg %p67
        %p322 = scmp.lt.s32.totalorder %s23, 1
        %s323 = scalar_select %p322, %s23, 1
        %s324 = smul.addr %s323, 8
        %s325 = scalar_lea.vmem %s2, %s324
        %p326 = pneg %p96
        %p327 = pneg %p93
        %p328 = pneg %p117
        %p329 = pneg %p114
        %p330 = pneg %p138
        %p331 = pneg %p135
        %p332 = pneg %p159
        %p333 = pneg %p156
        %p334 = pneg %p180
        %p335 = pneg %p177
        %p336 = pneg %p206
        %p337 = pneg %p203
        %s338 = sand.u32 %s193, 1
        %s339 = scalar_lea.sflag [#allocation4], %s338
        %s340 = sand.u32 %s193, 1
        %s341 = smul.addr %s340, 8
        %s342 = scalar_lea.vmem [#allocation8], %s341
        %p343 = scmp.lt.s32.totalorder %s23, 1
        %s344 = scalar_select %p343, %s23, 1
        %s345 = smul.addr %s344, 2
        %s346 = smul.addr %s345, 8
        %s347 = scalar_lea.vmem %s0, %s346
        %s348 = smul.u32 8, %s23
        %p349 = scmp.lt.s32.totalorder %s348, 15
        %s350 = scalar_select %p349, %s348, 15
        %s351 = smul.addr %s350, 8
        %s352 = scalar_lea.vmem %s1, %s351
        %s353 = smul.u32 8, %s23
        %p354 = scmp.lt.s32.totalorder %s23, 1
        %s355 = scalar_select %p354, %s23, 1
        %s356 = smul.addr %s355, 8
        %s357 = scalar_lea.vmem %s2, %s356
        %v359 = vld [vmem:[%s357] sm:$0xff]
        %v360 = vld [vmem:[%s347] sm:$0xff]
        %v361 = vld [vmem:[%s347 + $0x8] sm:$0xff]
        %v362 = vpack.c.bf16 %v360, %v360
        %v363 = vpack.c.bf16 %v361, %v361
        %v364 = vld [vmem:[#allocation2] sm:$0xff]
        %v365 = vld [vmem:[#allocation2 + $0x8] sm:$0xff]
        %v366 = vld [vmem:[#allocation2 + $0x10] sm:$0xff]
        %v367 = vld [vmem:[#allocation2 + $0x18] sm:$0xff]
        %v368 = vld [vmem:[#allocation2 + $0x20] sm:$0xff]
        %v369 = vld [vmem:[#allocation2 + $0x28] sm:$0xff]
        %v370 = vld [vmem:[#allocation2 + $0x30] sm:$0xff]
        %v371 = vld [vmem:[#allocation2 + $0x38] sm:$0xff]
        %v372 = vld [vmem:[#allocation2 + $0x40] sm:$0xff]
        %v373 = vld [vmem:[#allocation2 + $0x48] sm:$0xff]
        %v374 = vld [vmem:[#allocation2 + $0x50] sm:$0xff]
        %v375 = vld [vmem:[#allocation2 + $0x58] sm:$0xff]
        %v376 = vld [vmem:[#allocation2 + $0x60] sm:$0xff]
        %v377 = vld [vmem:[#allocation2 + $0x68] sm:$0xff]
        %v378 = vld [vmem:[#allocation2 + $0x70] sm:$0xff]
        %v379 = vld [vmem:[#allocation2 + $0x78] sm:$0xff]
        %v380 = vld [vmem:[#allocation2 + $0x80] sm:$0xff]
        %v381 = vld [vmem:[#allocation2 + $0x88] sm:$0xff]
        %v382 = vld [vmem:[#allocation2 + $0x90] sm:$0xff]
        %v383 = vld [vmem:[#allocation2 + $0x98] sm:$0xff]
        %v384 = vld [vmem:[#allocation2 + $0xa0] sm:$0xff]
        %v385 = vld [vmem:[#allocation2 + $0xa8] sm:$0xff]
        %v386 = vld [vmem:[#allocation2 + $0xb0] sm:$0xff]
        %v387 = vld [vmem:[#allocation2 + $0xb8] sm:$0xff]
        %v388 = vld [vmem:[#allocation2 + $0xc0] sm:$0xff]
        %v389 = vld [vmem:[#allocation2 + $0xc8] sm:$0xff]
        %v390 = vld [vmem:[#allocation2 + $0xd0] sm:$0xff]
        %v391 = vld [vmem:[#allocation2 + $0xd8] sm:$0xff]
        %v392 = vld [vmem:[#allocation2 + $0xe0] sm:$0xff]
        %v393 = vld [vmem:[#allocation2 + $0xe8] sm:$0xff]
        %v394 = vld [vmem:[#allocation2 + $0xf0] sm:$0xff]
        %v395 = vld [vmem:[#allocation2 + $0xf8] sm:$0xff]
        %v396 = vld [vmem:[#allocation2 + $0x100] sm:$0xff]
        %v397 = vld [vmem:[#allocation2 + $0x108] sm:$0xff]
        %v398 = vld [vmem:[#allocation2 + $0x110] sm:$0xff]
        %v399 = vld [vmem:[#allocation2 + $0x118] sm:$0xff]
        %v400 = vld [vmem:[#allocation2 + $0x120] sm:$0xff]
        %v401 = vld [vmem:[#allocation2 + $0x128] sm:$0xff]
        %v402 = vld [vmem:[#allocation2 + $0x130] sm:$0xff]
        %v403 = vld [vmem:[#allocation2 + $0x138] sm:$0xff]
        %v404 = vld [vmem:[#allocation2 + $0x140] sm:$0xff]
        %v405 = vld [vmem:[#allocation2 + $0x148] sm:$0xff]
        %v406 = vld [vmem:[#allocation2 + $0x150] sm:$0xff]
        %v407 = vld [vmem:[#allocation2 + $0x158] sm:$0xff]
        %v408 = vld [vmem:[#allocation2 + $0x160] sm:$0xff]
        %v409 = vld [vmem:[#allocation2 + $0x168] sm:$0xff]
        %v410 = vld [vmem:[#allocation2 + $0x170] sm:$0xff]
        %v411 = vld [vmem:[#allocation2 + $0x178] sm:$0xff]
        %v412 = vld [vmem:[#allocation2 + $0x180] sm:$0xff]
        %v413 = vld [vmem:[#allocation2 + $0x188] sm:$0xff]
        %v414 = vld [vmem:[#allocation2 + $0x190] sm:$0xff]
        %v415 = vld [vmem:[#allocation2 + $0x198] sm:$0xff]
        %v416 = vld [vmem:[#allocation2 + $0x1a0] sm:$0xff]
        %v417 = vld [vmem:[#allocation2 + $0x1a8] sm:$0xff]
        %v418 = vld [vmem:[#allocation2 + $0x1b0] sm:$0xff]
        %v419 = vld [vmem:[#allocation2 + $0x1b8] sm:$0xff]
        %v420 = vld [vmem:[#allocation2 + $0x1c0] sm:$0xff]
        %v421 = vld [vmem:[#allocation2 + $0x1c8] sm:$0xff]
        %v422 = vld [vmem:[#allocation2 + $0x1d0] sm:$0xff]
        %v423 = vld [vmem:[#allocation2 + $0x1d8] sm:$0xff]
        %v424 = vld [vmem:[#allocation2 + $0x1e0] sm:$0xff]
        %v425 = vld [vmem:[#allocation2 + $0x1e8] sm:$0xff]
        %v426 = vld [vmem:[#allocation2 + $0x1f0] sm:$0xff]
        %v427 = vld [vmem:[#allocation2 + $0x1f8] sm:$0xff]
        %v428 = vld [vmem:[#allocation5] ss:$8 sm:$0xf]
        %v430 = vlaneseq
        %v431 = vshrl.u32 %v430, 7
        %v432 = vsub.s32 0, %v431
        %v433 = vrot.slane %v428, %v432
        %v434 = vlaneseq
        %v435 = vshrl.u32 %v434, 7
        %v436 = vsub.s32 1, %v435
        %v437 = vrot.slane %v428, %v436
        %v438 = vlaneseq
        %v439 = vshrl.u32 %v438, 7
        %v440 = vsub.s32 2, %v439
        %v441 = vrot.slane %v428, %v440
        %v442 = vlaneseq
        %v443 = vshrl.u32 %v442, 7
        %v444 = vsub.s32 3, %v443
        %v445 = vrot.slane %v428, %v444
        %v514 = vunpack.c.l.b16 %v364
        %v515 = vunpack.c.h.b16 %v364
        %v516 = vunpack.c.l.b16 %v365
        %v517 = vunpack.c.h.b16 %v365
        %v518 = vunpack.c.l.b16 %v366
        %v519 = vunpack.c.h.b16 %v366
        %v520 = vunpack.c.l.b16 %v367
        %v521 = vunpack.c.h.b16 %v367
        %v522 = vunpack.c.l.b16 %v368
        %v523 = vunpack.c.h.b16 %v368
        %v524 = vunpack.c.l.b16 %v369
        %v525 = vunpack.c.h.b16 %v369
        %v526 = vunpack.c.l.b16 %v370
        %v527 = vunpack.c.h.b16 %v370
        %v528 = vunpack.c.l.b16 %v371
        %v529 = vunpack.c.h.b16 %v371
        %v530 = vunpack.c.l.b16 %v372
        %v531 = vunpack.c.h.b16 %v372
        %v532 = vunpack.c.l.b16 %v373
        %v533 = vunpack.c.h.b16 %v373
        %v534 = vunpack.c.l.b16 %v374
        %v535 = vunpack.c.h.b16 %v374
        %v536 = vunpack.c.l.b16 %v375
        %v537 = vunpack.c.h.b16 %v375
        %v538 = vunpack.c.l.b16 %v376
        %v539 = vunpack.c.h.b16 %v376
        %v540 = vunpack.c.l.b16 %v377
        %v541 = vunpack.c.h.b16 %v377
        %v542 = vunpack.c.l.b16 %v378
        %v543 = vunpack.c.h.b16 %v378
        %v544 = vunpack.c.l.b16 %v379
        %v545 = vunpack.c.h.b16 %v379
        %v546 = vunpack.c.l.b16 %v380
        %v547 = vunpack.c.h.b16 %v380
        %v548 = vunpack.c.l.b16 %v381
        %v549 = vunpack.c.h.b16 %v381
        %v550 = vunpack.c.l.b16 %v382
        %v551 = vunpack.c.h.b16 %v382
        %v552 = vunpack.c.l.b16 %v383
        %v553 = vunpack.c.h.b16 %v383
        %v554 = vunpack.c.l.b16 %v384
        %v555 = vunpack.c.h.b16 %v384
        %v556 = vunpack.c.l.b16 %v385
        %v557 = vunpack.c.h.b16 %v385
        %v558 = vunpack.c.l.b16 %v386
        %v559 = vunpack.c.h.b16 %v386
        %v560 = vunpack.c.l.b16 %v387
        %v561 = vunpack.c.h.b16 %v387
        %v562 = vunpack.c.l.b16 %v388
        %v563 = vunpack.c.h.b16 %v388
        %v564 = vunpack.c.l.b16 %v389
        %v565 = vunpack.c.h.b16 %v389
        %v566 = vunpack.c.l.b16 %v390
        %v567 = vunpack.c.h.b16 %v390
        %v568 = vunpack.c.l.b16 %v391
        %v569 = vunpack.c.h.b16 %v391
        %v570 = vunpack.c.l.b16 %v392
        %v571 = vunpack.c.h.b16 %v392
        %v572 = vunpack.c.l.b16 %v393
        %v573 = vunpack.c.h.b16 %v393
        %v574 = vunpack.c.l.b16 %v394
        %v575 = vunpack.c.h.b16 %v394
        %v576 = vunpack.c.l.b16 %v395
        %v577 = vunpack.c.h.b16 %v395
        %v578 = vunpack.c.l.b16 %v396
        %v579 = vunpack.c.h.b16 %v396
        %v580 = vunpack.c.l.b16 %v397
        %v581 = vunpack.c.h.b16 %v397
        %v582 = vunpack.c.l.b16 %v398
        %v583 = vunpack.c.h.b16 %v398
        %v584 = vunpack.c.l.b16 %v399
        %v585 = vunpack.c.h.b16 %v399
        %v586 = vunpack.c.l.b16 %v400
        %v587 = vunpack.c.h.b16 %v400
        %v588 = vunpack.c.l.b16 %v401
        %v589 = vunpack.c.h.b16 %v401
        %v590 = vunpack.c.l.b16 %v402
        %v591 = vunpack.c.h.b16 %v402
        %v592 = vunpack.c.l.b16 %v403
        %v593 = vunpack.c.h.b16 %v403
        %v594 = vunpack.c.l.b16 %v404
        %v595 = vunpack.c.h.b16 %v404
        %v596 = vunpack.c.l.b16 %v405
        %v597 = vunpack.c.h.b16 %v405
        %v598 = vunpack.c.l.b16 %v406
        %v599 = vunpack.c.h.b16 %v406
        %v600 = vunpack.c.l.b16 %v407
        %v601 = vunpack.c.h.b16 %v407
        %v602 = vunpack.c.l.b16 %v408
        %v603 = vunpack.c.h.b16 %v408
        %v604 = vunpack.c.l.b16 %v409
        %v605 = vunpack.c.h.b16 %v409
        %v606 = vunpack.c.l.b16 %v410
        %v607 = vunpack.c.h.b16 %v410
        %v608 = vunpack.c.l.b16 %v411
        %v609 = vunpack.c.h.b16 %v411
        %v610 = vunpack.c.l.b16 %v412
        %v611 = vunpack.c.h.b16 %v412
        %v612 = vunpack.c.l.b16 %v413
        %v613 = vunpack.c.h.b16 %v413
        %v614 = vunpack.c.l.b16 %v414
        %v615 = vunpack.c.h.b16 %v414
        %v616 = vunpack.c.l.b16 %v415
        %v617 = vunpack.c.h.b16 %v415
        %v618 = vunpack.c.l.b16 %v416
        %v619 = vunpack.c.h.b16 %v416
        %v620 = vunpack.c.l.b16 %v417
        %v621 = vunpack.c.h.b16 %v417
        %v622 = vunpack.c.l.b16 %v418
        %v623 = vunpack.c.h.b16 %v418
        %v624 = vunpack.c.l.b16 %v419
        %v625 = vunpack.c.h.b16 %v419
        %v626 = vunpack.c.l.b16 %v420
        %v627 = vunpack.c.h.b16 %v420
        %v628 = vunpack.c.l.b16 %v421
        %v629 = vunpack.c.h.b16 %v421
        %v630 = vunpack.c.l.b16 %v422
        %v631 = vunpack.c.h.b16 %v422
        %v632 = vunpack.c.l.b16 %v423
        %v633 = vunpack.c.h.b16 %v423
        %v634 = vunpack.c.l.b16 %v424
        %v635 = vunpack.c.h.b16 %v424
        %v636 = vunpack.c.l.b16 %v425
        %v637 = vunpack.c.h.b16 %v425
        %v638 = vunpack.c.l.b16 %v426
        %v639 = vunpack.c.h.b16 %v426
        %v640 = vunpack.c.l.b16 %v427
        %v641 = vunpack.c.h.b16 %v427
        %v642 = vpack.c.b16 %v518, %v514
        %v643 = vpack.c.b16 %v519, %v515
        %v644 = vpack.c.b16 %v520, %v516
        %v645 = vpack.c.b16 %v521, %v517
        %v646 = vpack.c.b16 %v526, %v522
        %v647 = vpack.c.b16 %v527, %v523
        %v648 = vpack.c.b16 %v528, %v524
        %v649 = vpack.c.b16 %v529, %v525
        %v650 = vpack.c.b16 %v534, %v530
        %v651 = vpack.c.b16 %v535, %v531
        %v652 = vpack.c.b16 %v536, %v532
        %v653 = vpack.c.b16 %v537, %v533
        %v654 = vpack.c.b16 %v542, %v538
        %v655 = vpack.c.b16 %v543, %v539
        %v656 = vpack.c.b16 %v544, %v540
        %v657 = vpack.c.b16 %v545, %v541
        %v658 = vpack.c.b16 %v550, %v546
        %v659 = vpack.c.b16 %v551, %v547
        %v660 = vpack.c.b16 %v552, %v548
        %v661 = vpack.c.b16 %v553, %v549
        %v662 = vpack.c.b16 %v558, %v554
        %v663 = vpack.c.b16 %v559, %v555
        %v664 = vpack.c.b16 %v560, %v556
        %v665 = vpack.c.b16 %v561, %v557
        %v666 = vpack.c.b16 %v566, %v562
        %v667 = vpack.c.b16 %v567, %v563
        %v668 = vpack.c.b16 %v568, %v564
        %v669 = vpack.c.b16 %v569, %v565
        %v670 = vpack.c.b16 %v574, %v570
        %v671 = vpack.c.b16 %v575, %v571
        %v672 = vpack.c.b16 %v576, %v572
        %v673 = vpack.c.b16 %v577, %v573
        %v674 = vpack.c.b16 %v582, %v578
        %v675 = vpack.c.b16 %v583, %v579
        %v676 = vpack.c.b16 %v584, %v580
        %v677 = vpack.c.b16 %v585, %v581
        %v678 = vpack.c.b16 %v590, %v586
        %v679 = vpack.c.b16 %v591, %v587
        %v680 = vpack.c.b16 %v592, %v588
        %v681 = vpack.c.b16 %v593, %v589
        %v682 = vpack.c.b16 %v598, %v594
        %v683 = vpack.c.b16 %v599, %v595
        %v684 = vpack.c.b16 %v600, %v596
        %v685 = vpack.c.b16 %v601, %v597
        %v686 = vpack.c.b16 %v606, %v602
        %v687 = vpack.c.b16 %v607, %v603
        %v688 = vpack.c.b16 %v608, %v604
        %v689 = vpack.c.b16 %v609, %v605
        %v690 = vpack.c.b16 %v614, %v610
        %v691 = vpack.c.b16 %v615, %v611
        %v692 = vpack.c.b16 %v616, %v612
        %v693 = vpack.c.b16 %v617, %v613
        %v694 = vpack.c.b16 %v622, %v618
        %v695 = vpack.c.b16 %v623, %v619
        %v696 = vpack.c.b16 %v624, %v620
        %v697 = vpack.c.b16 %v625, %v621
        %v698 = vpack.c.b16 %v630, %v626
        %v699 = vpack.c.b16 %v631, %v627
        %v700 = vpack.c.b16 %v632, %v628
        %v701 = vpack.c.b16 %v633, %v629
        %v702 = vpack.c.b16 %v638, %v634
        %v703 = vpack.c.b16 %v639, %v635
        %v704 = vpack.c.b16 %v640, %v636
        %v705 = vpack.c.b16 %v641, %v637
        %770 = vmatprep.subr.bf16.mxu0 %v643
        %771 = vmatpush1.bf16.msra.mxu0 %v642
        %772 = vmatprep.subr.bf16.mxu0 %v647
        %773 = vmatpush1.bf16.msra.mxu0 %v646
        %774 = vmatprep.subr.bf16.mxu0 %v651
        %775 = vmatpush1.bf16.msra.mxu0 %v650
        %776 = vmatprep.subr.bf16.mxu0 %v655
        %777 = vmatpush1.bf16.msra.mxu0 %v654
        %778 = vmatprep.subr.bf16.mxu0 %v659
        %779 = vmatpush1.bf16.msra.mxu0 %v658
        %780 = vmatprep.subr.bf16.mxu0 %v663
        %781 = vmatpush1.bf16.msra.mxu0 %v662
        %782 = vmatprep.subr.bf16.mxu0 %v667
        %783 = vmatpush1.bf16.msra.mxu0 %v666
        %784 = vmatprep.subr.bf16.mxu0 %v671
        %785 = vmatpush1.bf16.msra.mxu0 %v670
        %786 = vmatprep.subr.bf16.mxu0 %v675
        %787 = vmatpush1.bf16.msra.mxu0 %v674
        %788 = vmatprep.subr.bf16.mxu0 %v679
        %789 = vmatpush1.bf16.msra.mxu0 %v678
        %790 = vmatprep.subr.bf16.mxu0 %v683
        %791 = vmatpush1.bf16.msra.mxu0 %v682
        %792 = vmatprep.subr.bf16.mxu0 %v687
        %793 = vmatpush1.bf16.msra.mxu0 %v686
        %794 = vmatprep.subr.bf16.mxu0 %v691
        %795 = vmatpush1.bf16.msra.mxu0 %v690
        %796 = vmatprep.subr.bf16.mxu0 %v695
        %797 = vmatpush1.bf16.msra.mxu0 %v694
        %798 = vmatprep.subr.bf16.mxu0 %v699
        %799 = vmatpush1.bf16.msra.mxu0 %v698
        %800 = vmatprep.subr.bf16.mxu0 %v703
        %801 = vmatpush1.bf16.msra.mxu0 %v702
        %802 = vmatprep.mubr.bf16.mxu0 %v363
        %803 = vmatmul.mubr.bf16.gmra.mrb[0].mxu0 %v362
        %v804 = vpop.f32.mrb[0].mxu0
        %v805 = vadd.f32 %v433, %v804
        %v806 = vpop.f32.mrb[0].mxu0
        %v807 = vadd.f32 %v437, %v806
        %v808 = vpop.f32.mrb[0].mxu0
        %v809 = vpop.f32.mrb[0].mxu0
        %810 = vdwg.mxu0
        %811 = vmatprep.subr.bf16.mxu0 %v645
        %812 = vmatpush1.bf16.msra.mxu0 %v644
        %813 = vmatprep.subr.bf16.mxu0 %v649
        %814 = vmatpush1.bf16.msra.mxu0 %v648
        %815 = vmatprep.subr.bf16.mxu0 %v653
        %816 = vmatpush1.bf16.msra.mxu0 %v652
        %817 = vmatprep.subr.bf16.mxu0 %v657
        %818 = vmatpush1.bf16.msra.mxu0 %v656
        %819 = vmatprep.subr.bf16.mxu0 %v661
        %820 = vmatpush1.bf16.msra.mxu0 %v660
        %821 = vmatprep.subr.bf16.mxu0 %v665
        %822 = vmatpush1.bf16.msra.mxu0 %v664
        %823 = vmatprep.subr.bf16.mxu0 %v669
        %824 = vmatpush1.bf16.msra.mxu0 %v668
        %825 = vmatprep.subr.bf16.mxu0 %v673
        %826 = vmatpush1.bf16.msra.mxu0 %v672
        %827 = vmatprep.subr.bf16.mxu0 %v677
        %828 = vmatpush1.bf16.msra.mxu0 %v676
        %829 = vmatprep.subr.bf16.mxu0 %v681
        %830 = vmatpush1.bf16.msra.mxu0 %v680
        %831 = vmatprep.subr.bf16.mxu0 %v685
        %832 = vmatpush1.bf16.msra.mxu0 %v684
        %833 = vmatprep.subr.bf16.mxu0 %v689
        %834 = vmatpush1.bf16.msra.mxu0 %v688
        %835 = vmatprep.subr.bf16.mxu0 %v693
        %836 = vmatpush1.bf16.msra.mxu0 %v692
        %837 = vmatprep.subr.bf16.mxu0 %v697
        %838 = vmatpush1.bf16.msra.mxu0 %v696
        %839 = vmatprep.subr.bf16.mxu0 %v701
        %840 = vmatpush1.bf16.msra.mxu0 %v700
        %841 = vmatprep.subr.bf16.mxu0 %v705
        %842 = vmatpush1.bf16.msra.mxu0 %v704
        %843 = vmatprep.mubr.bf16.mxu0 %v363
        %844 = vmatmul.mubr.bf16.gmra.mrb[0].mxu0 %v362
        %v845 = vpop.f32.mrb[0].mxu0
        %v846 = vadd.f32 %v441, %v845
        %v847 = vpop.f32.mrb[0].mxu0
        %v848 = vadd.f32 %v445, %v847
        %v849 = vpop.f32.mrb[0].mxu0
        %v850 = vpop.f32.mrb[0].mxu0
        %851 = vdwg.mxu0
        %v856 = vcombine.low %v805, %v807
        %v857 = vcombine.high %v805, %v807
        %v858 = vcombine.low %v846, %v848
        %v859 = vcombine.high %v846, %v848
        %v861 = vunpack.c.l.s4 1966171168
        %v862 = vunpack.c.0.s8 %v861
        %v863 = vlaneseq
        %v864 = vshrl.u32 %v863, 7
        %v865 = vsub.s32 %v862, %v864
        %v866 = vrot.slane %v856, %v865
        %v868 = vunpack.c.l.s4 1966171168
        %v869 = vunpack.c.0.s8 %v868
        %v870 = vlaneseq
        %v871 = vshrl.u32 %v870, 7
        %v872 = vsub.s32 %v869, %v871
        %v873 = vrot.slane %v857, %v872
        %v875 = vunpack.c.l.s4 1966171168
        %v876 = vunpack.c.0.s8 %v875
        %v877 = vlaneseq
        %v878 = vshrl.u32 %v877, 7
        %v879 = vsub.s32 %v876, %v878
        %v880 = vrot.slane %v858, %v879
        %v882 = vunpack.c.l.s4 1966171168
        %v883 = vunpack.c.0.s8 %v882
        %v884 = vlaneseq
        %v885 = vshrl.u32 %v884, 7
        %v886 = vsub.s32 %v883, %v885
        %v887 = vrot.slane %v859, %v886
        %v888 = vcombine.low %v866, %v880
        %v889 = vcombine.high %v866, %v880
        %v890 = vcombine.low %v873, %v887
        %v891 = vcombine.high %v873, %v887
        %v893 = vunpack.c.l.s4 1966171168
        %v894 = vunpack.c.0.s8 %v893
        %v895 = vlaneseq
        %v896 = vshrl.u32 %v895, 7
        %v897 = vsub.s32 %v894, %v896
        %v898 = vrot.slane %v888, %v897
        %v900 = vunpack.c.l.s4 1966171168
        %v901 = vunpack.c.0.s8 %v900
        %v902 = vlaneseq
        %v903 = vshrl.u32 %v902, 7
        %v904 = vsub.s32 %v901, %v903
        %v905 = vrot.slane %v890, %v904
        %v907 = vunpack.c.l.s4 1966171168
        %v908 = vunpack.c.0.s8 %v907
        %v909 = vlaneseq
        %v910 = vshrl.u32 %v909, 7
        %v911 = vsub.s32 %v908, %v910
        %v912 = vrot.slane %v889, %v911
        %v914 = vunpack.c.l.s4 1966171168
        %v915 = vunpack.c.0.s8 %v914
        %v916 = vlaneseq
        %v917 = vshrl.u32 %v916, 7
        %v918 = vsub.s32 %v915, %v917
        %v919 = vrot.slane %v891, %v918
        %v920 = vcombine.high %v898, %v898
        %v921 = vcombine.high %v905, %v905
        %v922 = vcombine.high %v912, %v912
        %v923 = vcombine.high %v919, %v919
        %v924 = vlaneseq
        %v925 = vshrl.u32 %v924, 7
        %v926 = vsub.s32 0, %v925
        %v927 = vrot.slane %v898, %v926
        %v928 = vlaneseq
        %v929 = vshrl.u32 %v928, 7
        %v930 = vsub.s32 1, %v929
        %v931 = vrot.slane %v898, %v930
        %v932 = vlaneseq
        %v933 = vshrl.u32 %v932, 7
        %v934 = vsub.s32 2, %v933
        %v935 = vrot.slane %v898, %v934
        %v936 = vlaneseq
        %v937 = vshrl.u32 %v936, 7
        %v938 = vsub.s32 3, %v937
        %v939 = vrot.slane %v898, %v938
        %v940 = vlaneseq
        %v941 = vshrl.u32 %v940, 7
        %v942 = vsub.s32 0, %v941
        %v943 = vrot.slane %v912, %v942
        %v944 = vlaneseq
        %v945 = vshrl.u32 %v944, 7
        %v946 = vsub.s32 1, %v945
        %v947 = vrot.slane %v912, %v946
        %v948 = vlaneseq
        %v949 = vshrl.u32 %v948, 7
        %v950 = vsub.s32 2, %v949
        %v951 = vrot.slane %v912, %v950
        %v952 = vlaneseq
        %v953 = vshrl.u32 %v952, 7
        %v954 = vsub.s32 3, %v953
        %v955 = vrot.slane %v912, %v954
        %v956 = vlaneseq
        %v957 = vshrl.u32 %v956, 7
        %v958 = vsub.s32 0, %v957
        %v959 = vrot.slane %v920, %v958
        %v960 = vlaneseq
        %v961 = vshrl.u32 %v960, 7
        %v962 = vsub.s32 1, %v961
        %v963 = vrot.slane %v920, %v962
        %v964 = vlaneseq
        %v965 = vshrl.u32 %v964, 7
        %v966 = vsub.s32 2, %v965
        %v967 = vrot.slane %v920, %v966
        %v968 = vlaneseq
        %v969 = vshrl.u32 %v968, 7
        %v970 = vsub.s32 3, %v969
        %v971 = vrot.slane %v920, %v970
        %v972 = vlaneseq
        %v973 = vshrl.u32 %v972, 7
        %v974 = vsub.s32 0, %v973
        %v975 = vrot.slane %v922, %v974
        %v976 = vlaneseq
        %v977 = vshrl.u32 %v976, 7
        %v978 = vsub.s32 1, %v977
        %v979 = vrot.slane %v922, %v978
        %v980 = vlaneseq
        %v981 = vshrl.u32 %v980, 7
        %v982 = vsub.s32 2, %v981
        %v983 = vrot.slane %v922, %v982
        %v984 = vlaneseq
        %v985 = vshrl.u32 %v984, 7
        %v986 = vsub.s32 3, %v985
        %v987 = vrot.slane %v922, %v986
        %v988 = vlaneseq
        %v989 = vshrl.u32 %v988, 7
        %v990 = vsub.s32 0, %v989
        %v991 = vrot.slane %v905, %v990
        %v992 = vlaneseq
        %v993 = vshrl.u32 %v992, 7
        %v994 = vsub.s32 1, %v993
        %v995 = vrot.slane %v905, %v994
        %v996 = vlaneseq
        %v997 = vshrl.u32 %v996, 7
        %v998 = vsub.s32 2, %v997
        %v999 = vrot.slane %v905, %v998
        %v1000 = vlaneseq
        %v1001 = vshrl.u32 %v1000, 7
        %v1002 = vsub.s32 3, %v1001
        %v1003 = vrot.slane %v905, %v1002
        %v1004 = vlaneseq
        %v1005 = vshrl.u32 %v1004, 7
        %v1006 = vsub.s32 0, %v1005
        %v1007 = vrot.slane %v919, %v1006
        %v1008 = vlaneseq
        %v1009 = vshrl.u32 %v1008, 7
        %v1010 = vsub.s32 1, %v1009
        %v1011 = vrot.slane %v919, %v1010
        %v1012 = vlaneseq
        %v1013 = vshrl.u32 %v1012, 7
        %v1014 = vsub.s32 2, %v1013
        %v1015 = vrot.slane %v919, %v1014
        %v1016 = vlaneseq
        %v1017 = vshrl.u32 %v1016, 7
        %v1018 = vsub.s32 3, %v1017
        %v1019 = vrot.slane %v919, %v1018
        %v1020 = vlaneseq
        %v1021 = vshrl.u32 %v1020, 7
        %v1022 = vsub.s32 0, %v1021
        %v1023 = vrot.slane %v921, %v1022
        %v1024 = vlaneseq
        %v1025 = vshrl.u32 %v1024, 7
        %v1026 = vsub.s32 1, %v1025
        %v1027 = vrot.slane %v921, %v1026
        %v1028 = vlaneseq
        %v1029 = vshrl.u32 %v1028, 7
        %v1030 = vsub.s32 2, %v1029
        %v1031 = vrot.slane %v921, %v1030
        %v1032 = vlaneseq
        %v1033 = vshrl.u32 %v1032, 7
        %v1034 = vsub.s32 3, %v1033
        %v1035 = vrot.slane %v921, %v1034
        %v1036 = vlaneseq
        %v1037 = vshrl.u32 %v1036, 7
        %v1038 = vsub.s32 0, %v1037
        %v1039 = vrot.slane %v923, %v1038
        %v1040 = vlaneseq
        %v1041 = vshrl.u32 %v1040, 7
        %v1042 = vsub.s32 1, %v1041
        %v1043 = vrot.slane %v923, %v1042
        %v1044 = vlaneseq
        %v1045 = vshrl.u32 %v1044, 7
        %v1046 = vsub.s32 2, %v1045
        %v1047 = vrot.slane %v923, %v1046
        %v1048 = vlaneseq
        %v1049 = vshrl.u32 %v1048, 7
        %v1050 = vsub.s32 3, %v1049
        %v1051 = vrot.slane %v923, %v1050
        %v1085 = vcombine.high %v359, %v359
        %v1087 = vunpack.c.l.s4 1966171168
        %v1088 = vunpack.c.0.s8 %v1087
        %v1089 = vlaneseq
        %v1090 = vshrl.u32 %v1089, 7
        %v1091 = vsub.s32 %v1088, %v1090
        %v1092 = vrot.slane %v359, %v1091
        %v1094 = vunpack.c.l.s4 1966171168
        %v1095 = vunpack.c.0.s8 %v1094
        %v1096 = vlaneseq
        %v1097 = vshrl.u32 %v1096, 7
        %v1098 = vsub.s32 %v1095, %v1097
        %v1099 = vrot.slane %v1085, %v1098
        %v1100 = vcombine.high %v1092, %v1092
        %v1101 = vcombine.high %v1099, %v1099
        %v1103 = vunpack.c.l.s4 1966171168
        %v1104 = vunpack.c.0.s8 %v1103
        %v1105 = vlaneseq
        %v1106 = vshrl.u32 %v1105, 7
        %v1107 = vsub.s32 %v1104, %v1106
        %v1108 = vrot.slane %v1092, %v1107
        %v1110 = vunpack.c.l.s4 1966171168
        %v1111 = vunpack.c.0.s8 %v1110
        %v1112 = vlaneseq
        %v1113 = vshrl.u32 %v1112, 7
        %v1114 = vsub.s32 %v1111, %v1113
        %v1115 = vrot.slane %v1099, %v1114
        %v1117 = vunpack.c.l.s4 1966171168
        %v1118 = vunpack.c.0.s8 %v1117
        %v1119 = vlaneseq
        %v1120 = vshrl.u32 %v1119, 7
        %v1121 = vsub.s32 %v1118, %v1120
        %v1122 = vrot.slane %v1100, %v1121
        %v1124 = vunpack.c.l.s4 1966171168
        %v1125 = vunpack.c.0.s8 %v1124
        %v1126 = vlaneseq
        %v1127 = vshrl.u32 %v1126, 7
        %v1128 = vsub.s32 %v1125, %v1127
        %v1129 = vrot.slane %v1101, %v1128
        %v1130 = vcombine.high %v1108, %v1108
        %v1131 = vcombine.high %v1115, %v1115
        %v1132 = vcombine.high %v1122, %v1122
        %v1133 = vcombine.high %v1129, %v1129
        %v1134 = vlaneseq
        %v1135 = vshrl.u32 %v1134, 7
        %v1136 = vsub.s32 0, %v1135
        %v1137 = vrot.slane %v1108, %v1136
        %v1138 = vlaneseq
        %v1139 = vshrl.u32 %v1138, 7
        %v1140 = vsub.s32 0, %v1139
        %v1141 = vrot.slane %v1122, %v1140
        %v1142 = vlaneseq
        %v1143 = vshrl.u32 %v1142, 7
        %v1144 = vsub.s32 0, %v1143
        %v1145 = vrot.slane %v1130, %v1144
        %v1146 = vlaneseq
        %v1147 = vshrl.u32 %v1146, 7
        %v1148 = vsub.s32 0, %v1147
        %v1149 = vrot.slane %v1132, %v1148
        %v1150 = vlaneseq
        %v1151 = vshrl.u32 %v1150, 7
        %v1152 = vsub.s32 0, %v1151
        %v1153 = vrot.slane %v1115, %v1152
        %v1154 = vlaneseq
        %v1155 = vshrl.u32 %v1154, 7
        %v1156 = vsub.s32 0, %v1155
        %v1157 = vrot.slane %v1129, %v1156
        %v1158 = vlaneseq
        %v1159 = vshrl.u32 %v1158, 7
        %v1160 = vsub.s32 0, %v1159
        %v1161 = vrot.slane %v1131, %v1160
        %v1162 = vlaneseq
        %v1163 = vshrl.u32 %v1162, 7
        %v1164 = vsub.s32 0, %v1163
        %v1165 = vrot.slane %v1133, %v1164
        %v1166 = vld [vmem:[%s352] sm:$0xff]
        %v1167 = vld [vmem:[%s352 + $0x8] sm:$0xff]
        %v1168 = vld [vmem:[%s352 + $0x10] sm:$0xff]
        %v1169 = vld [vmem:[%s352 + $0x18] sm:$0xff]
        %v1170 = vld [vmem:[%s352 + $0x20] sm:$0xff]
        %v1171 = vld [vmem:[%s352 + $0x28] sm:$0xff]
        %v1172 = vld [vmem:[%s352 + $0x30] sm:$0xff]
        %v1173 = vld [vmem:[%s352 + $0x38] sm:$0xff]
        %v1174 = vpack.c.bf16 %v1167, %v1166
        %v1175 = vpack.c.bf16 %v1169, %v1168
        %v1176 = vpack.c.bf16 %v1171, %v1170
        %v1177 = vpack.c.bf16 %v1173, %v1172
        %v1178 = vld [vmem:[%s4] sm:$0xff]
        %v1179 = vld [vmem:[%s4 + $0xc] sm:$0xff]
        %v1180 = vld [vmem:[%s4 + $0x18] sm:$0xff]
        %v1181 = vld [vmem:[%s4 + $0x24] sm:$0xff]
        %s1182 = scalar_lea.vmem [#allocation5], 1
        %v1183 = vld [vmem:[%s1182] ss:$8 sm:$0x3]
        %v1185 = vlaneseq
        %v1186 = vshrl.u32 %v1185, 7
        %v1187 = vsub.s32 0, %v1186
        %v1188 = vrot.slane %v1183, %v1187
        %v1189 = vlaneseq
        %v1190 = vshrl.u32 %v1189, 7
        %v1191 = vsub.s32 1, %v1190
        %v1192 = vrot.slane %v1183, %v1191
        %v1199 = vunpack.c.l.b16 %v1178
        %v1200 = vunpack.c.h.b16 %v1178
        %v1201 = vunpack.c.l.b16 %v1179
        %v1202 = vunpack.c.h.b16 %v1179
        %v1203 = vunpack.c.l.b16 %v1180
        %v1204 = vunpack.c.h.b16 %v1180
        %v1205 = vunpack.c.l.b16 %v1181
        %v1206 = vunpack.c.h.b16 %v1181
        %v1207 = vpack.c.b16 %v1201, %v1199
        %v1208 = vpack.c.b16 %v1202, %v1200
        %v1209 = vpack.c.b16 %v1205, %v1203
        %v1210 = vpack.c.b16 %v1206, %v1204
        %vm1215 = vcmask 261120
        %v1217 = vsel %vm1215, %v1174, 0
        %v1220 = vsel %vm1215, %v1175, 0
        %v1223 = vsel %vm1215, %v1176, 0
        %v1226 = vsel %vm1215, %v1177, 0
        %1228 = vmatprep.subr.bf16.mxu0 %v1208
        %1229 = vmatpush1.bf16.msra.mxu0 %v1207
        %1230 = vmatprep.subr.bf16.mxu0 %v1210
        %1231 = vmatpush1.bf16.msra.mxu0 %v1209
        %1232 = vmatprep.subr.bf16.mxu0 0
        %1233 = vmatpush1.bf16.msra.mxu0 0
        %1234 = vmatprep.subr.bf16.mxu0 0
        %1235 = vmatpush1.bf16.msra.mxu0 0
        %1236 = vmatprep.subr.bf16.mxu0 0
        %1237 = vmatpush1.bf16.msra.mxu0 0
        %1238 = vmatprep.subr.bf16.mxu0 0
        %1239 = vmatpush1.bf16.msra.mxu0 0
        %1240 = vmatprep.subr.bf16.mxu0 0
        %1241 = vmatpush1.bf16.msra.mxu0 0
        %1242 = vmatprep.subr.bf16.mxu0 0
        %1243 = vmatpush1.bf16.msra.mxu0 0
        %1244 = vmatprep.subr.bf16.mxu0 0
        %1245 = vmatpush1.bf16.msra.mxu0 0
        %1246 = vmatprep.subr.bf16.mxu0 0
        %1247 = vmatpush1.bf16.msra.mxu0 0
        %1248 = vmatprep.subr.bf16.mxu0 0
        %1249 = vmatpush1.bf16.msra.mxu0 0
        %1250 = vmatprep.subr.bf16.mxu0 0
        %1251 = vmatpush1.bf16.msra.mxu0 0
        %1252 = vmatprep.subr.bf16.mxu0 0
        %1253 = vmatpush1.bf16.msra.mxu0 0
        %1254 = vmatprep.subr.bf16.mxu0 0
        %1255 = vmatpush1.bf16.msra.mxu0 0
        %1256 = vmatprep.subr.bf16.mxu0 0
        %1257 = vmatpush1.bf16.msra.mxu0 0
        %1258 = vmatprep.subr.bf16.mxu0 0
        %1259 = vmatpush1.bf16.msra.mxu0 0
        %1260 = vmatprep.mubr.bf16.mxu0 0
        %1261 = vmatmul.mubr.bf16.gmra.mrb[0].mxu0 %v1217
        %v1262 = vpop.f32.mrb[0].mxu0
        %v1263 = vadd.f32 %v1188, %v1262
        %v1264 = vpop.f32.mrb[0].mxu0
        %v1265 = vadd.f32 %v1192, %v1264
        %v1266 = vpop.f32.mrb[0].mxu0
        %v1267 = vadd.f32 %v1188, %v1266
        %v1268 = vpop.f32.mrb[0].mxu0
        %v1269 = vadd.f32 %v1192, %v1268
        %1270 = vmatprep.mubr.bf16.mxu0 0
        %1271 = vmatmul.mubr.bf16.gmra.mrb[0].mxu0 %v1220
        %v1272 = vpop.f32.mrb[0].mxu0
        %v1273 = vadd.f32 %v1188, %v1272
        %v1274 = vpop.f32.mrb[0].mxu0
        %v1275 = vadd.f32 %v1192, %v1274
        %v1276 = vpop.f32.mrb[0].mxu0
        %v1277 = vadd.f32 %v1188, %v1276
        %v1278 = vpop.f32.mrb[0].mxu0
        %v1279 = vadd.f32 %v1192, %v1278
        %1280 = vmatprep.mubr.bf16.mxu0 0
        %1281 = vmatmul.mubr.bf16.gmra.mrb[0].mxu0 %v1223
        %v1282 = vpop.f32.mrb[0].mxu0
        %v1283 = vadd.f32 %v1188, %v1282
        %v1284 = vpop.f32.mrb[0].mxu0
        %v1285 = vadd.f32 %v1192, %v1284
        %v1286 = vpop.f32.mrb[0].mxu0
        %v1287 = vadd.f32 %v1188, %v1286
        %v1288 = vpop.f32.mrb[0].mxu0
        %v1289 = vadd.f32 %v1192, %v1288
        %1290 = vmatprep.mubr.bf16.mxu0 0
        %1291 = vmatmul.mubr.bf16.gmra.mrb[0].mxu0 %v1226
        %v1292 = vpop.f32.mrb[0].mxu0
        %v1293 = vadd.f32 %v1188, %v1292
        %v1294 = vpop.f32.mrb[0].mxu0
        %v1295 = vadd.f32 %v1192, %v1294
        %v1296 = vpop.f32.mrb[0].mxu0
        %v1297 = vadd.f32 %v1188, %v1296
        %v1298 = vpop.f32.mrb[0].mxu0
        %v1299 = vadd.f32 %v1192, %v1298
        %1300 = vdwg.mxu0
        %v1301 = vmul.f32 %v1263, %v927
        %v1302 = vmul.f32 %v1265, %v931
        %v1303 = vmul.f32 %v1267, %v943
        %v1304 = vmul.f32 %v1269, %v947
        %v1305 = vmul.f32 %v1273, %v959
        %v1306 = vmul.f32 %v1275, %v963
        %v1307 = vmul.f32 %v1277, %v975
        %v1308 = vmul.f32 %v1279, %v979
        %v1309 = vmul.f32 %v1283, %v991
        %v1310 = vmul.f32 %v1285, %v995
        %v1311 = vmul.f32 %v1287, %v1007
        %v1312 = vmul.f32 %v1289, %v1011
        %v1313 = vmul.f32 %v1293, %v1023
        %v1314 = vmul.f32 %v1295, %v1027
        %v1315 = vmul.f32 %v1297, %v1039
        %v1316 = vmul.f32 %v1299, %v1043
        %v1317 = vpack.c.bf16 %v1303, %v1301
        %v1318 = vpack.c.bf16 %v1304, %v1302
        %v1319 = vpack.c.bf16 %v1307, %v1305
        %v1320 = vpack.c.bf16 %v1308, %v1306
        %v1321 = vpack.c.bf16 %v1311, %v1309
        %v1322 = vpack.c.bf16 %v1312, %v1310
        %v1323 = vpack.c.bf16 %v1315, %v1313
        %v1324 = vpack.c.bf16 %v1316, %v1314
        %v1325 = vld [vmem:[#allocation7] sm:$0xf]
        %v1326 = vld [vmem:[#allocation7 + $0xc] sm:$0xf]
        %v1327 = vld [vmem:[#allocation7 + $0x18] sm:$0xf]
        %v1328 = vld [vmem:[#allocation7 + $0x24] sm:$0xf]
        %v1329 = vld [vmem:[#allocation7 + $0x30] sm:$0xf]
        %v1330 = vld [vmem:[#allocation7 + $0x3c] sm:$0xf]
        %v1331 = vld [vmem:[#allocation7 + $0x48] sm:$0xf]
        %v1332 = vld [vmem:[#allocation7 + $0x54] sm:$0xf]
        %v1333 = vld [vmem:[#allocation7 + $0x60] sm:$0xf]
        %v1334 = vld [vmem:[#allocation7 + $0x6c] sm:$0xf]
        %v1335 = vld [vmem:[#allocation7 + $0x78] sm:$0xf]
        %v1336 = vld [vmem:[#allocation7 + $0x84] sm:$0xf]
        %v1337 = vld [vmem:[#allocation7 + $0x90] sm:$0xf]
        %v1338 = vld [vmem:[#allocation7 + $0x9c] sm:$0xf]
        %v1339 = vld [vmem:[#allocation7 + $0xa8] sm:$0xf]
        %v1340 = vld [vmem:[#allocation7 + $0xb4] sm:$0xf]
        %v1341 = vld [vmem:[#allocation7 + $0xc0] sm:$0xf]
        %v1342 = vld [vmem:[#allocation7 + $0xcc] sm:$0xf]
        %v1343 = vld [vmem:[#allocation7 + $0xd8] sm:$0xf]
        %v1344 = vld [vmem:[#allocation7 + $0xe4] sm:$0xf]
        %v1345 = vld [vmem:[#allocation7 + $0xf0] sm:$0xf]
        %v1346 = vld [vmem:[#allocation7 + $0xfc] sm:$0xf]
        %v1347 = vld [vmem:[#allocation7 + $0x108] sm:$0xf]
        %v1348 = vld [vmem:[#allocation7 + $0x114] sm:$0xf]
        %v1349 = vld [vmem:[#allocation7 + $0x120] sm:$0xf]
        %v1350 = vld [vmem:[#allocation7 + $0x12c] sm:$0xf]
        %v1351 = vld [vmem:[#allocation7 + $0x138] sm:$0xf]
        %v1352 = vld [vmem:[#allocation7 + $0x144] sm:$0xf]
        %v1353 = vld [vmem:[#allocation7 + $0x150] sm:$0xf]
        %v1354 = vld [vmem:[#allocation7 + $0x15c] sm:$0xf]
        %v1355 = vld [vmem:[#allocation7 + $0x168] sm:$0xf]
        %v1356 = vld [vmem:[#allocation7 + $0x174] sm:$0xf]
        %v1389 = vunpack.c.l.b16 %v1325
        %v1390 = vunpack.c.l.b16 %v1326
        %v1391 = vunpack.c.l.b16 %v1327
        %v1392 = vunpack.c.l.b16 %v1328
        %v1393 = vunpack.c.l.b16 %v1329
        %v1394 = vunpack.c.l.b16 %v1330
        %v1395 = vunpack.c.l.b16 %v1331
        %v1396 = vunpack.c.l.b16 %v1332
        %v1397 = vunpack.c.l.b16 %v1333
        %v1398 = vunpack.c.l.b16 %v1334
        %v1399 = vunpack.c.l.b16 %v1335
        %v1400 = vunpack.c.l.b16 %v1336
        %v1401 = vunpack.c.l.b16 %v1337
        %v1402 = vunpack.c.l.b16 %v1338
        %v1403 = vunpack.c.l.b16 %v1339
        %v1404 = vunpack.c.l.b16 %v1340
        %v1405 = vunpack.c.l.b16 %v1341
        %v1406 = vunpack.c.l.b16 %v1342
        %v1407 = vunpack.c.l.b16 %v1343
        %v1408 = vunpack.c.l.b16 %v1344
        %v1409 = vunpack.c.l.b16 %v1345
        %v1410 = vunpack.c.l.b16 %v1346
        %v1411 = vunpack.c.l.b16 %v1347
        %v1412 = vunpack.c.l.b16 %v1348
        %v1413 = vunpack.c.l.b16 %v1349
        %v1414 = vunpack.c.l.b16 %v1350
        %v1415 = vunpack.c.l.b16 %v1351
        %v1416 = vunpack.c.l.b16 %v1352
        %v1417 = vunpack.c.l.b16 %v1353
        %v1418 = vunpack.c.l.b16 %v1354
        %v1419 = vunpack.c.l.b16 %v1355
        %v1420 = vunpack.c.l.b16 %v1356
        %v1421 = vpack.c.b16 %v1390, %v1389
        %v1422 = vpack.c.b16 %v1392, %v1391
        %v1423 = vpack.c.b16 %v1394, %v1393
        %v1424 = vpack.c.b16 %v1396, %v1395
        %v1425 = vpack.c.b16 %v1398, %v1397
        %v1426 = vpack.c.b16 %v1400, %v1399
        %v1427 = vpack.c.b16 %v1402, %v1401
        %v1428 = vpack.c.b16 %v1404, %v1403
        %v1429 = vpack.c.b16 %v1406, %v1405
        %v1430 = vpack.c.b16 %v1408, %v1407
        %v1431 = vpack.c.b16 %v1410, %v1409
        %v1432 = vpack.c.b16 %v1412, %v1411
        %v1433 = vpack.c.b16 %v1414, %v1413
        %v1434 = vpack.c.b16 %v1416, %v1415
        %v1435 = vpack.c.b16 %v1418, %v1417
        %v1436 = vpack.c.b16 %v1420, %v1419
        %1453 = vmatprep.subr.bf16.mxu0 0
        %1454 = vmatpush1.bf16.msra.mxu0 %v1421
        %1455 = vmatprep.subr.bf16.mxu0 0
        %1456 = vmatpush1.bf16.msra.mxu0 %v1422
        %1457 = vmatprep.subr.bf16.mxu0 0
        %1458 = vmatpush1.bf16.msra.mxu0 %v1423
        %1459 = vmatprep.subr.bf16.mxu0 0
        %1460 = vmatpush1.bf16.msra.mxu0 %v1424
        %1461 = vmatprep.subr.bf16.mxu0 0
        %1462 = vmatpush1.bf16.msra.mxu0 %v1425
        %1463 = vmatprep.subr.bf16.mxu0 0
        %1464 = vmatpush1.bf16.msra.mxu0 %v1426
        %1465 = vmatprep.subr.bf16.mxu0 0
        %1466 = vmatpush1.bf16.msra.mxu0 %v1427
        %1467 = vmatprep.subr.bf16.mxu0 0
        %1468 = vmatpush1.bf16.msra.mxu0 %v1428
        %1469 = vmatprep.subr.bf16.mxu0 0
        %1470 = vmatpush1.bf16.msra.mxu0 %v1429
        %1471 = vmatprep.subr.bf16.mxu0 0
        %1472 = vmatpush1.bf16.msra.mxu0 %v1430
        %1473 = vmatprep.subr.bf16.mxu0 0
        %1474 = vmatpush1.bf16.msra.mxu0 %v1431
        %1475 = vmatprep.subr.bf16.mxu0 0
        %1476 = vmatpush1.bf16.msra.mxu0 %v1432
        %1477 = vmatprep.subr.bf16.mxu0 0
        %1478 = vmatpush1.bf16.msra.mxu0 %v1433
        %1479 = vmatprep.subr.bf16.mxu0 0
        %1480 = vmatpush1.bf16.msra.mxu0 %v1434
        %1481 = vmatprep.subr.bf16.mxu0 0
        %1482 = vmatpush1.bf16.msra.mxu0 %v1435
        %1483 = vmatprep.subr.bf16.mxu0 0
        %1484 = vmatpush1.bf16.msra.mxu0 %v1436
        %1485 = vmatprep.mubr.bf16.mxu0 %v1318
        %1486 = vmatmul.mubr.bf16.gmra.mrb[0].mxu0 %v1317
        %v1487 = vpop.f32.mrb[0].mxu0
        %v1488 = vadd.f32 0.0, %v1487
        %v1489 = vpop.f32.mrb[0].mxu0
        %v1490 = vpop.f32.mrb[0].mxu0
        %v1491 = vadd.f32 0.0, %v1490
        %v1492 = vpop.f32.mrb[0].mxu0
        %1493 = vmatprep.mubr.bf16.mxu0 %v1320
        %1494 = vmatmul.mubr.bf16.gmra.mrb[0].mxu0 %v1319
        %v1495 = vpop.f32.mrb[0].mxu0
        %v1496 = vadd.f32 0.0, %v1495
        %v1497 = vpop.f32.mrb[0].mxu0
        %v1498 = vpop.f32.mrb[0].mxu0
        %v1499 = vadd.f32 0.0, %v1498
        %v1500 = vpop.f32.mrb[0].mxu0
        %1501 = vmatprep.mubr.bf16.mxu0 %v1322
        %1502 = vmatmul.mubr.bf16.gmra.mrb[0].mxu0 %v1321
        %v1503 = vpop.f32.mrb[0].mxu0
        %v1504 = vadd.f32 0.0, %v1503
        %v1505 = vpop.f32.mrb[0].mxu0
        %v1506 = vpop.f32.mrb[0].mxu0
        %v1507 = vadd.f32 0.0, %v1506
        %v1508 = vpop.f32.mrb[0].mxu0
        %1509 = vmatprep.mubr.bf16.mxu0 %v1324
        %1510 = vmatmul.mubr.bf16.gmra.mrb[0].mxu0 %v1323
        %v1511 = vpop.f32.mrb[0].mxu0
        %v1512 = vadd.f32 0.0, %v1511
        %v1513 = vpop.f32.mrb[0].mxu0
        %v1514 = vpop.f32.mrb[0].mxu0
        %v1515 = vadd.f32 0.0, %v1514
        %v1516 = vpop.f32.mrb[0].mxu0
        %1517 = vdwg.mxu0
        %v1518 = vld [vmem:[#allocation5 + $0x19] ss:$0 sm:$0xff]
        %1519 = vset.pattern.permute.xlu0 0
        %1520 = vperm.xlu0 %1519, %v1137
        %v1521 = vpop.permute.xlu0 %1520
        %1523 = vset.pattern.permute.xlu0 0
        %1524 = vperm.xlu0 %1523, %v1141
        %v1525 = vpop.permute.xlu0 %1524
        %1527 = vset.pattern.permute.xlu0 0
        %1528 = vperm.xlu0 %1527, %v1145
        %v1529 = vpop.permute.xlu0 %1528
        %1531 = vset.pattern.permute.xlu0 0
        %1532 = vperm.xlu0 %1531, %v1149
        %v1533 = vpop.permute.xlu0 %1532
        %1535 = vset.pattern.permute.xlu0 0
        %1536 = vperm.xlu0 %1535, %v1153
        %v1537 = vpop.permute.xlu0 %1536
        %1539 = vset.pattern.permute.xlu0 0
        %1540 = vperm.xlu0 %1539, %v1157
        %v1541 = vpop.permute.xlu0 %1540
        %1543 = vset.pattern.permute.xlu0 0
        %1544 = vperm.xlu0 %1543, %v1161
        %v1545 = vpop.permute.xlu0 %1544
        %1547 = vset.pattern.permute.xlu0 0
        %1548 = vperm.xlu0 %1547, %v1165
        %v1549 = vpop.permute.xlu0 %1548
        %vm1551 = vcmp.lt.f32.partialorder %v1518, %v1521
        %vm1552 = vcmp.lt.f32.partialorder %v1518, %v1525
        %vm1553 = vcmp.lt.f32.partialorder %v1518, %v1529
        %vm1554 = vcmp.lt.f32.partialorder %v1518, %v1533
        %vm1555 = vcmp.lt.f32.partialorder %v1518, %v1537
        %vm1556 = vcmp.lt.f32.partialorder %v1518, %v1541
        %vm1557 = vcmp.lt.f32.partialorder %v1518, %v1545
        %vm1558 = vcmp.lt.f32.partialorder %v1518, %v1549
        %1567 = vrot.lane.b32.xlu0 %v1488, 64
        %v1568 = vpop.permute.xlu0 %1567
        %1569 = vrot.lane.b32.xlu0 %v1491, 64
        %v1570 = vpop.permute.xlu0 %1569
        %1571 = vrot.lane.b32.xlu0 %v1496, 64
        %v1572 = vpop.permute.xlu0 %1571
        %1573 = vrot.lane.b32.xlu0 %v1499, 64
        %v1574 = vpop.permute.xlu0 %1573
        %1575 = vrot.lane.b32.xlu0 %v1504, 64
        %v1576 = vpop.permute.xlu0 %1575
        %1577 = vrot.lane.b32.xlu0 %v1507, 64
        %v1578 = vpop.permute.xlu0 %1577
        %1579 = vrot.lane.b32.xlu0 %v1512, 64
        %v1580 = vpop.permute.xlu0 %1579
        %1581 = vrot.lane.b32.xlu0 %v1515, 64
        %v1582 = vpop.permute.xlu0 %1581
        %v1591 = vsel %vm1551, %v1568, -1e+30
        %v1592 = vsel %vm1552, %v1570, -1e+30
        %v1593 = vsel %vm1553, %v1572, -1e+30
        %v1594 = vsel %vm1554, %v1574, -1e+30
        %v1595 = vsel %vm1555, %v1576, -1e+30
        %v1596 = vsel %vm1556, %v1578, -1e+30
        %v1597 = vsel %vm1557, %v1580, -1e+30
        %v1598 = vsel %vm1558, %v1582, -1e+30
        %vm1599 = vcmask 785920
        %v1600 = vsel %vm1599, %v1591, -inf
        %1601 = vmax.xlane.f32.xlu0 %v1600
        %v1602 = vpop.xlane.xlu0 %1601
        %v1603 = vsel %vm1599, %v1592, -inf
        %1604 = vmax.xlane.f32.xlu0 %v1603
        %v1605 = vpop.xlane.xlu0 %1604
        %v1606 = vsel %vm1599, %v1593, -inf
        %1607 = vmax.xlane.f32.xlu0 %v1606
        %v1608 = vpop.xlane.xlu0 %1607
        %v1609 = vsel %vm1599, %v1594, -inf
        %1610 = vmax.xlane.f32.xlu0 %v1609
        %v1611 = vpop.xlane.xlu0 %1610
        %v1612 = vsel %vm1599, %v1595, -inf
        %1613 = vmax.xlane.f32.xlu0 %v1612
        %v1614 = vpop.xlane.xlu0 %1613
        %v1615 = vsel %vm1599, %v1596, -inf
        %1616 = vmax.xlane.f32.xlu0 %v1615
        %v1617 = vpop.xlane.xlu0 %1616
        %v1618 = vsel %vm1599, %v1597, -inf
        %1619 = vmax.xlane.f32.xlu0 %v1618
        %v1620 = vpop.xlane.xlu0 %1619
        %v1621 = vsel %vm1599, %v1598, -inf
        %1622 = vmax.xlane.f32.xlu0 %v1621
        %v1623 = vpop.xlane.xlu0 %1622
        %v1624 = vsub.f32 %v1591, %v1602
        %v1625 = vsub.f32 %v1592, %v1605
        %v1626 = vsub.f32 %v1593, %v1608
        %v1627 = vsub.f32 %v1594, %v1611
        %v1628 = vsub.f32 %v1595, %v1614
        %v1629 = vsub.f32 %v1596, %v1617
        %v1630 = vsub.f32 %v1597, %v1620
        %v1631 = vsub.f32 %v1598, %v1623
        %v1632 = vmul.f32 %v1624, 1.442695
        %v1633 = vpow.pop %v1632
        %v1634 = vmul.f32 %v1625, 1.442695
        %v1635 = vpow.pop %v1634
        %v1636 = vmul.f32 %v1626, 1.442695
        %v1637 = vpow.pop %v1636
        %v1638 = vmul.f32 %v1627, 1.442695
        %v1639 = vpow.pop %v1638
        %v1640 = vmul.f32 %v1628, 1.442695
        %v1641 = vpow.pop %v1640
        %v1642 = vmul.f32 %v1629, 1.442695
        %v1643 = vpow.pop %v1642
        %v1644 = vmul.f32 %v1630, 1.442695
        %v1645 = vpow.pop %v1644
        %v1646 = vmul.f32 %v1631, 1.442695
        %v1647 = vpow.pop %v1646
        %v1648 = vpack.c.bf16 %v1635, %v1633
        %v1649 = vpack.c.bf16 %v1639, %v1637
        %v1650 = vpack.c.bf16 %v1643, %v1641
        %v1651 = vpack.c.bf16 %v1647, %v1645
        %v1652 = vld [vmem:[#allocation7 + $0x188] sm:$0xf]
        %v1653 = vld [vmem:[#allocation7 + $0x194] sm:$0xf]
        %v1654 = vld [vmem:[#allocation7 + $0x1a0] sm:$0xf]
        %v1655 = vld [vmem:[#allocation7 + $0x1ac] sm:$0xf]
        %1660 = vrot.lane.b32.xlu0 %v1648, 64
        %v1661 = vpop.permute.xlu0 %1660
        %1662 = vrot.lane.b32.xlu0 %v1649, 64
        %v1663 = vpop.permute.xlu0 %1662
        %1664 = vrot.lane.b32.xlu0 %v1650, 64
        %v1665 = vpop.permute.xlu0 %1664
        %1666 = vrot.lane.b32.xlu0 %v1651, 64
        %v1667 = vpop.permute.xlu0 %1666
        %v1672 = vunpack.c.l.b16 %v1652
        %v1673 = vunpack.c.l.b16 %v1653
        %v1674 = vunpack.c.l.b16 %v1654
        %v1675 = vunpack.c.l.b16 %v1655
        %v1676 = vpack.c.b16 %v1673, %v1672
        %v1677 = vpack.c.b16 %v1675, %v1674
        %v1681 = vsel %vm1215, %v1661, 0
        %v1684 = vsel %vm1215, %v1663, 0
        %v1687 = vsel %vm1215, %v1665, 0
        %v1690 = vsel %vm1215, %v1667, 0
        %1692 = vmatprep.subr.bf16.mxu0 0
        %1693 = vmatpush1.bf16.msra.mxu0 %v1676
        %1694 = vmatprep.subr.bf16.mxu0 0
        %1695 = vmatpush1.bf16.msra.mxu0 %v1677
        %1696 = vmatprep.subr.bf16.mxu0 0
        %1697 = vmatpush1.bf16.msra.mxu0 0
        %1698 = vmatprep.subr.bf16.mxu0 0
        %1699 = vmatpush1.bf16.msra.mxu0 0
        %1700 = vmatprep.subr.bf16.mxu0 0
        %1701 = vmatpush1.bf16.msra.mxu0 0
        %1702 = vmatprep.subr.bf16.mxu0 0
        %1703 = vmatpush1.bf16.msra.mxu0 0
        %1704 = vmatprep.subr.bf16.mxu0 0
        %1705 = vmatpush1.bf16.msra.mxu0 0
        %1706 = vmatprep.subr.bf16.mxu0 0
        %1707 = vmatpush1.bf16.msra.mxu0 0
        %1708 = vmatprep.subr.bf16.mxu0 0
        %1709 = vmatpush1.bf16.msra.mxu0 0
        %1710 = vmatprep.subr.bf16.mxu0 0
        %1711 = vmatpush1.bf16.msra.mxu0 0
        %1712 = vmatprep.subr.bf16.mxu0 0
        %1713 = vmatpush1.bf16.msra.mxu0 0
        %1714 = vmatprep.subr.bf16.mxu0 0
        %1715 = vmatpush1.bf16.msra.mxu0 0
        %1716 = vmatprep.subr.bf16.mxu0 0
        %1717 = vmatpush1.bf16.msra.mxu0 0
        %1718 = vmatprep.subr.bf16.mxu0 0
        %1719 = vmatpush1.bf16.msra.mxu0 0
        %1720 = vmatprep.subr.bf16.mxu0 0
        %1721 = vmatpush1.bf16.msra.mxu0 0
        %1722 = vmatprep.subr.bf16.mxu0 0
        %1723 = vmatpush1.bf16.msra.mxu0 0
        %1724 = vmatprep.mubr.bf16.mxu0 0
        %1725 = vmatmul.mubr.bf16.gmra.mrb[0].mxu0 %v1681
        %v1726 = vpop.f32.mrb[0].mxu0
        %v1727 = vadd.f32 0.0, %v1726
        %v1728 = vpop.f32.mrb[0].mxu0
        %v1729 = vpop.f32.mrb[0].mxu0
        %v1730 = vadd.f32 0.0, %v1729
        %v1731 = vpop.f32.mrb[0].mxu0
        %1732 = vmatprep.mubr.bf16.mxu0 0
        %1733 = vmatmul.mubr.bf16.gmra.mrb[0].mxu0 %v1684
        %v1734 = vpop.f32.mrb[0].mxu0
        %v1735 = vadd.f32 0.0, %v1734
        %v1736 = vpop.f32.mrb[0].mxu0
        %v1737 = vpop.f32.mrb[0].mxu0
        %v1738 = vadd.f32 0.0, %v1737
        %v1739 = vpop.f32.mrb[0].mxu0
        %1740 = vmatprep.mubr.bf16.mxu0 0
        %1741 = vmatmul.mubr.bf16.gmra.mrb[0].mxu0 %v1687
        %v1742 = vpop.f32.mrb[0].mxu0
        %v1743 = vadd.f32 0.0, %v1742
        %v1744 = vpop.f32.mrb[0].mxu0
        %v1745 = vpop.f32.mrb[0].mxu0
        %v1746 = vadd.f32 0.0, %v1745
        %v1747 = vpop.f32.mrb[0].mxu0
        %1748 = vmatprep.mubr.bf16.mxu0 0
        %1749 = vmatmul.mubr.bf16.gmra.mrb[0].mxu0 %v1690
        %v1750 = vpop.f32.mrb[0].mxu0
        %v1751 = vadd.f32 0.0, %v1750
        %v1752 = vpop.f32.mrb[0].mxu0
        %v1753 = vpop.f32.mrb[0].mxu0
        %v1754 = vadd.f32 0.0, %v1753
        %v1755 = vpop.f32.mrb[0].mxu0
        %1756 = vdwg.mxu0
        %v1757 = vrcp.pop %v1727
        %v1758 = vrcp.pop %v1730
        %v1759 = vrcp.pop %v1735
        %v1760 = vrcp.pop %v1738
        %v1761 = vrcp.pop %v1743
        %v1762 = vrcp.pop %v1746
        %v1763 = vrcp.pop %v1751
        %v1764 = vrcp.pop %v1754
        %1773 = vrot.lane.b32.xlu0 %v1757, 64
        %v1774 = vpop.permute.xlu0 %1773
        %1775 = vrot.lane.b32.xlu0 %v1758, 64
        %v1776 = vpop.permute.xlu0 %1775
        %1777 = vrot.lane.b32.xlu0 %v1759, 64
        %v1778 = vpop.permute.xlu0 %1777
        %1779 = vrot.lane.b32.xlu0 %v1760, 64
        %v1780 = vpop.permute.xlu0 %1779
        %1781 = vrot.lane.b32.xlu0 %v1761, 64
        %v1782 = vpop.permute.xlu0 %1781
        %1783 = vrot.lane.b32.xlu0 %v1762, 64
        %v1784 = vpop.permute.xlu0 %1783
        %1785 = vrot.lane.b32.xlu0 %v1763, 64
        %v1786 = vpop.permute.xlu0 %1785
        %1787 = vrot.lane.b32.xlu0 %v1764, 64
        %v1788 = vpop.permute.xlu0 %1787
        %v1797 = vmul.f32 %v1633, %v1774
        %v1798 = vmul.f32 %v1635, %v1776
        %v1799 = vmul.f32 %v1637, %v1778
        %v1800 = vmul.f32 %v1639, %v1780
        %v1801 = vmul.f32 %v1641, %v1782
        %v1802 = vmul.f32 %v1643, %v1784
        %v1803 = vmul.f32 %v1645, %v1786
        %v1804 = vmul.f32 %v1647, %v1788
        %v1805 = vpack.c.bf16 %v1798, %v1797
        %v1806 = vpack.c.bf16 %v1800, %v1799
        %v1807 = vpack.c.bf16 %v1802, %v1801
        %v1808 = vpack.c.bf16 %v1804, %v1803
        %v1809 = vld [vmem:[#allocation7 + $0x180] sm:$0xff]
        %v1810 = vld [vmem:[#allocation7 + $0x18c] sm:$0xff]
        %v1811 = vld [vmem:[#allocation7 + $0x198] sm:$0xff]
        %v1812 = vld [vmem:[#allocation7 + $0x1a4] sm:$0xff]
        %1817 = vrot.lane.b32.xlu0 %v1805, 64
        %v1818 = vpop.permute.xlu0 %1817
        %1819 = vrot.lane.b32.xlu0 %v1806, 64
        %v1820 = vpop.permute.xlu0 %1819
        %1821 = vrot.lane.b32.xlu0 %v1807, 64
        %v1822 = vpop.permute.xlu0 %1821
        %1823 = vrot.lane.b32.xlu0 %v1808, 64
        %v1824 = vpop.permute.xlu0 %1823
        %v1829 = vunpack.c.l.b16 %v1809
        %v1830 = vunpack.c.h.b16 %v1809
        %v1831 = vunpack.c.l.b16 %v1810
        %v1832 = vunpack.c.h.b16 %v1810
        %v1833 = vunpack.c.l.b16 %v1811
        %v1834 = vunpack.c.h.b16 %v1811
        %v1835 = vunpack.c.l.b16 %v1812
        %v1836 = vunpack.c.h.b16 %v1812
        %v1837 = vpack.c.b16 %v1831, %v1829
        %v1838 = vpack.c.b16 %v1832, %v1830
        %v1839 = vpack.c.b16 %v1835, %v1833
        %v1840 = vpack.c.b16 %v1836, %v1834
        %v1846 = vsel %vm1215, %v1818, 0
        %v1849 = vsel %vm1215, %v1820, 0
        %v1852 = vsel %vm1215, %v1822, 0
        %v1855 = vsel %vm1215, %v1824, 0
        %1857 = vmatprep.subr.bf16.mxu0 %v1838
        %1858 = vmatpush1.bf16.msra.mxu0 %v1837
        %1859 = vmatprep.subr.bf16.mxu0 %v1840
        %1860 = vmatpush1.bf16.msra.mxu0 %v1839
        %1861 = vmatprep.subr.bf16.mxu0 0
        %1862 = vmatpush1.bf16.msra.mxu0 0
        %1863 = vmatprep.subr.bf16.mxu0 0
        %1864 = vmatpush1.bf16.msra.mxu0 0
        %1865 = vmatprep.subr.bf16.mxu0 0
        %1866 = vmatpush1.bf16.msra.mxu0 0
        %1867 = vmatprep.subr.bf16.mxu0 0
        %1868 = vmatpush1.bf16.msra.mxu0 0
        %1869 = vmatprep.subr.bf16.mxu0 0
        %1870 = vmatpush1.bf16.msra.mxu0 0
        %1871 = vmatprep.subr.bf16.mxu0 0
        %1872 = vmatpush1.bf16.msra.mxu0 0
        %1873 = vmatprep.subr.bf16.mxu0 0
        %1874 = vmatpush1.bf16.msra.mxu0 0
        %1875 = vmatprep.subr.bf16.mxu0 0
        %1876 = vmatpush1.bf16.msra.mxu0 0
        %1877 = vmatprep.subr.bf16.mxu0 0
        %1878 = vmatpush1.bf16.msra.mxu0 0
        %1879 = vmatprep.subr.bf16.mxu0 0
        %1880 = vmatpush1.bf16.msra.mxu0 0
        %1881 = vmatprep.subr.bf16.mxu0 0
        %1882 = vmatpush1.bf16.msra.mxu0 0
        %1883 = vmatprep.subr.bf16.mxu0 0
        %1884 = vmatpush1.bf16.msra.mxu0 0
        %1885 = vmatprep.subr.bf16.mxu0 0
        %1886 = vmatpush1.bf16.msra.mxu0 0
        %1887 = vmatprep.subr.bf16.mxu0 0
        %1888 = vmatpush1.bf16.msra.mxu0 0
        %1889 = vmatprep.mubr.bf16.mxu0 0
        %1890 = vmatmul.mubr.bf16.gmra.mrb[0].mxu0 %v1846
        %v1891 = vpop.f32.mrb[0].mxu0
        %v1892 = vadd.f32 0.0, %v1891
        %v1893 = vpop.f32.mrb[0].mxu0
        %v1894 = vadd.f32 0.0, %v1893
        %v1895 = vpop.f32.mrb[0].mxu0
        %v1896 = vadd.f32 0.0, %v1895
        %v1897 = vpop.f32.mrb[0].mxu0
        %v1898 = vadd.f32 0.0, %v1897
        %1899 = vmatprep.mubr.bf16.mxu0 0
        %1900 = vmatmul.mubr.bf16.gmra.mrb[0].mxu0 %v1849
        %v1901 = vpop.f32.mrb[0].mxu0
        %v1902 = vadd.f32 0.0, %v1901
        %v1903 = vpop.f32.mrb[0].mxu0
        %v1904 = vadd.f32 0.0, %v1903
        %v1905 = vpop.f32.mrb[0].mxu0
        %v1906 = vadd.f32 0.0, %v1905
        %v1907 = vpop.f32.mrb[0].mxu0
        %v1908 = vadd.f32 0.0, %v1907
        %1909 = vmatprep.mubr.bf16.mxu0 0
        %1910 = vmatmul.mubr.bf16.gmra.mrb[0].mxu0 %v1852
        %v1911 = vpop.f32.mrb[0].mxu0
        %v1912 = vadd.f32 0.0, %v1911
        %v1913 = vpop.f32.mrb[0].mxu0
        %v1914 = vadd.f32 0.0, %v1913
        %v1915 = vpop.f32.mrb[0].mxu0
        %v1916 = vadd.f32 0.0, %v1915
        %v1917 = vpop.f32.mrb[0].mxu0
        %v1918 = vadd.f32 0.0, %v1917
        %1919 = vmatprep.mubr.bf16.mxu0 0
        %1920 = vmatmul.mubr.bf16.gmra.mrb[0].mxu0 %v1855
        %v1921 = vpop.f32.mrb[0].mxu0
        %v1922 = vadd.f32 0.0, %v1921
        %v1923 = vpop.f32.mrb[0].mxu0
        %v1924 = vadd.f32 0.0, %v1923
        %v1925 = vpop.f32.mrb[0].mxu0
        %v1926 = vadd.f32 0.0, %v1925
        %v1927 = vpop.f32.mrb[0].mxu0
        %v1928 = vadd.f32 0.0, %v1927
        %1929 = vdwg.mxu0
        %v1930 = vmul.f32 %v1892, %v935
        %v1931 = vmul.f32 %v1894, %v939
        %v1932 = vmul.f32 %v1896, %v951
        %v1933 = vmul.f32 %v1898, %v955
        %v1934 = vmul.f32 %v1902, %v967
        %v1935 = vmul.f32 %v1904, %v971
        %v1936 = vmul.f32 %v1906, %v983
        %v1937 = vmul.f32 %v1908, %v987
        %v1938 = vmul.f32 %v1912, %v999
        %v1939 = vmul.f32 %v1914, %v1003
        %v1940 = vmul.f32 %v1916, %v1015
        %v1941 = vmul.f32 %v1918, %v1019
        %v1942 = vmul.f32 %v1922, %v1031
        %v1943 = vmul.f32 %v1924, %v1035
        %v1944 = vmul.f32 %v1926, %v1047
        %v1945 = vmul.f32 %v1928, %v1051
        %v1946 = vpack.c.bf16 %v1932, %v1930
        %v1947 = vpack.c.bf16 %v1933, %v1931
        %v1948 = vpack.c.bf16 %v1936, %v1934
        %v1949 = vpack.c.bf16 %v1937, %v1935
        %v1950 = vpack.c.bf16 %v1940, %v1938
        %v1951 = vpack.c.bf16 %v1941, %v1939
        %v1952 = vpack.c.bf16 %v1944, %v1942
        %v1953 = vpack.c.bf16 %v1945, %v1943
        %1954 = vrot.lane.b32.xlu0 %v1421, 96
        %v1955 = vpop.permute.xlu0 %1954
        %1956 = vrot.lane.b32.xlu0 %v1422, 96
        %v1957 = vpop.permute.xlu0 %1956
        %1958 = vrot.lane.b32.xlu0 %v1423, 96
        %v1959 = vpop.permute.xlu0 %1958
        %1960 = vrot.lane.b32.xlu0 %v1424, 96
        %v1961 = vpop.permute.xlu0 %1960
        %1962 = vrot.lane.b32.xlu0 %v1425, 96
        %v1963 = vpop.permute.xlu0 %1962
        %1964 = vrot.lane.b32.xlu0 %v1426, 96
        %v1965 = vpop.permute.xlu0 %1964
        %1966 = vrot.lane.b32.xlu0 %v1427, 96
        %v1967 = vpop.permute.xlu0 %1966
        %1968 = vrot.lane.b32.xlu0 %v1428, 96
        %v1969 = vpop.permute.xlu0 %1968
        %1970 = vrot.lane.b32.xlu0 %v1429, 96
        %v1971 = vpop.permute.xlu0 %1970
        %1972 = vrot.lane.b32.xlu0 %v1430, 96
        %v1973 = vpop.permute.xlu0 %1972
        %1974 = vrot.lane.b32.xlu0 %v1431, 96
        %v1975 = vpop.permute.xlu0 %1974
        %1976 = vrot.lane.b32.xlu0 %v1432, 96
        %v1977 = vpop.permute.xlu0 %1976
        %1978 = vrot.lane.b32.xlu0 %v1433, 96
        %v1979 = vpop.permute.xlu0 %1978
        %1980 = vrot.lane.b32.xlu0 %v1434, 96
        %v1981 = vpop.permute.xlu0 %1980
        %1982 = vrot.lane.b32.xlu0 %v1435, 96
        %v1983 = vpop.permute.xlu0 %1982
        %1984 = vrot.lane.b32.xlu0 %v1436, 96
        %v1985 = vpop.permute.xlu0 %1984
        %2002 = vmatprep.subr.bf16.mxu0 0
        %2003 = vmatpush1.bf16.msra.mxu0 %v1955
        %2004 = vmatprep.subr.bf16.mxu0 0
        %2005 = vmatpush1.bf16.msra.mxu0 %v1957
        %2006 = vmatprep.subr.bf16.mxu0 0
        %2007 = vmatpush1.bf16.msra.mxu0 %v1959
        %2008 = vmatprep.subr.bf16.mxu0 0
        %2009 = vmatpush1.bf16.msra.mxu0 %v1961
        %2010 = vmatprep.subr.bf16.mxu0 0
        %2011 = vmatpush1.bf16.msra.mxu0 %v1963
        %2012 = vmatprep.subr.bf16.mxu0 0
        %2013 = vmatpush1.bf16.msra.mxu0 %v1965
        %2014 = vmatprep.subr.bf16.mxu0 0
        %2015 = vmatpush1.bf16.msra.mxu0 %v1967
        %2016 = vmatprep.subr.bf16.mxu0 0
        %2017 = vmatpush1.bf16.msra.mxu0 %v1969
        %2018 = vmatprep.subr.bf16.mxu0 0
        %2019 = vmatpush1.bf16.msra.mxu0 %v1971
        %2020 = vmatprep.subr.bf16.mxu0 0
        %2021 = vmatpush1.bf16.msra.mxu0 %v1973
        %2022 = vmatprep.subr.bf16.mxu0 0
        %2023 = vmatpush1.bf16.msra.mxu0 %v1975
        %2024 = vmatprep.subr.bf16.mxu0 0
        %2025 = vmatpush1.bf16.msra.mxu0 %v1977
        %2026 = vmatprep.subr.bf16.mxu0 0
        %2027 = vmatpush1.bf16.msra.mxu0 %v1979
        %2028 = vmatprep.subr.bf16.mxu0 0
        %2029 = vmatpush1.bf16.msra.mxu0 %v1981
        %2030 = vmatprep.subr.bf16.mxu0 0
        %2031 = vmatpush1.bf16.msra.mxu0 %v1983
        %2032 = vmatprep.subr.bf16.mxu0 0
        %2033 = vmatpush1.bf16.msra.mxu0 %v1985
        %2034 = vmatprep.mubr.bf16.mxu0 %v1947
        %2035 = vmatmul.mubr.bf16.gmra.mrb[0].mxu0 %v1946
        %v2036 = vpop.f32.mrb[0].mxu0
        %v2037 = vadd.f32 0.0, %v2036
        %v2038 = vpop.f32.mrb[0].mxu0
        %v2039 = vpop.f32.mrb[0].mxu0
        %v2040 = vadd.f32 0.0, %v2039
        %v2041 = vpop.f32.mrb[0].mxu0
        %2042 = vmatprep.mubr.bf16.mxu0 %v1949
        %2043 = vmatmul.mubr.bf16.gmra.mrb[0].mxu0 %v1948
        %v2044 = vpop.f32.mrb[0].mxu0
        %v2045 = vadd.f32 0.0, %v2044
        %v2046 = vpop.f32.mrb[0].mxu0
        %v2047 = vpop.f32.mrb[0].mxu0
        %v2048 = vadd.f32 0.0, %v2047
        %v2049 = vpop.f32.mrb[0].mxu0
        %2050 = vmatprep.mubr.bf16.mxu0 %v1951
        %2051 = vmatmul.mubr.bf16.gmra.mrb[0].mxu0 %v1950
        %v2052 = vpop.f32.mrb[0].mxu0
        %v2053 = vadd.f32 0.0, %v2052
        %v2054 = vpop.f32.mrb[0].mxu0
        %v2055 = vpop.f32.mrb[0].mxu0
        %v2056 = vadd.f32 0.0, %v2055
        %v2057 = vpop.f32.mrb[0].mxu0
        %2058 = vmatprep.mubr.bf16.mxu0 %v1953
        %2059 = vmatmul.mubr.bf16.gmra.mrb[0].mxu0 %v1952
        %v2060 = vpop.f32.mrb[0].mxu0
        %v2061 = vadd.f32 0.0, %v2060
        %v2062 = vpop.f32.mrb[0].mxu0
        %v2063 = vpop.f32.mrb[0].mxu0
        %v2064 = vadd.f32 0.0, %v2063
        %v2065 = vpop.f32.mrb[0].mxu0
        %2066 = vdwg.mxu0
        %v2067 = vpack.c.bf16 %v2040, %v2037
        %v2068 = vpack.c.bf16 %v2048, %v2045
        %v2069 = vpack.c.bf16 %v2056, %v2053
        %v2070 = vpack.c.bf16 %v2064, %v2061
        %v2071 = vld [vmem:[%s4 + $0x8] sm:$0xf]
        %v2072 = vld [vmem:[%s4 + $0x14] sm:$0xf]
        %v2073 = vld [vmem:[%s4 + $0x20] sm:$0xf]
        %v2074 = vld [vmem:[%s4 + $0x2c] sm:$0xf]
        %v2075 = vld [vmem:[#allocation5 + $0x11] ss:$0 sm:$0xff]
        %v2080 = vunpack.c.l.b16 %v2071
        %v2081 = vunpack.c.l.b16 %v2072
        %v2082 = vunpack.c.l.b16 %v2073
        %v2083 = vunpack.c.l.b16 %v2074
        %v2084 = vpack.c.b16 %v2081, %v2080
        %v2085 = vpack.c.b16 %v2083, %v2082
        %v2089 = vsel %vm1215, %v2067, 0
        %v2092 = vsel %vm1215, %v2068, 0
        %v2095 = vsel %vm1215, %v2069, 0
        %v2098 = vsel %vm1215, %v2070, 0
        %2100 = vmatprep.subr.bf16.mxu0 0
        %2101 = vmatpush1.bf16.msra.mxu0 %v2084
        %2102 = vmatprep.subr.bf16.mxu0 0
        %2103 = vmatpush1.bf16.msra.mxu0 %v2085
        %2104 = vmatprep.subr.bf16.mxu0 0
        %2105 = vmatpush1.bf16.msra.mxu0 0
        %2106 = vmatprep.subr.bf16.mxu0 0
        %2107 = vmatpush1.bf16.msra.mxu0 0
        %2108 = vmatprep.subr.bf16.mxu0 0
        %2109 = vmatpush1.bf16.msra.mxu0 0
        %2110 = vmatprep.subr.bf16.mxu0 0
        %2111 = vmatpush1.bf16.msra.mxu0 0
        %2112 = vmatprep.subr.bf16.mxu0 0
        %2113 = vmatpush1.bf16.msra.mxu0 0
        %2114 = vmatprep.subr.bf16.mxu0 0
        %2115 = vmatpush1.bf16.msra.mxu0 0
        %2116 = vmatprep.subr.bf16.mxu0 0
        %2117 = vmatpush1.bf16.msra.mxu0 0
        %2118 = vmatprep.subr.bf16.mxu0 0
        %2119 = vmatpush1.bf16.msra.mxu0 0
        %2120 = vmatprep.subr.bf16.mxu0 0
        %2121 = vmatpush1.bf16.msra.mxu0 0
        %2122 = vmatprep.subr.bf16.mxu0 0
        %2123 = vmatpush1.bf16.msra.mxu0 0
        %2124 = vmatprep.subr.bf16.mxu0 0
        %2125 = vmatpush1.bf16.msra.mxu0 0
        %2126 = vmatprep.subr.bf16.mxu0 0
        %2127 = vmatpush1.bf16.msra.mxu0 0
        %2128 = vmatprep.subr.bf16.mxu0 0
        %2129 = vmatpush1.bf16.msra.mxu0 0
        %2130 = vmatprep.subr.bf16.mxu0 0
        %2131 = vmatpush1.bf16.msra.mxu0 0
        %2132 = vmatprep.mubr.bf16.mxu0 0
        %2133 = vmatmul.mubr.bf16.gmra.mrb[0].mxu0 %v2089
        %v2134 = vpop.f32.mrb[0].mxu0
        %v2135 = vadd.f32 %v2075, %v2134
        %v2136 = vpop.f32.mrb[0].mxu0
        %v2137 = vpop.f32.mrb[0].mxu0
        %v2138 = vadd.f32 %v2075, %v2137
        %v2139 = vpop.f32.mrb[0].mxu0
        %2140 = vmatprep.mubr.bf16.mxu0 0
        %2141 = vmatmul.mubr.bf16.gmra.mrb[0].mxu0 %v2092
        %v2142 = vpop.f32.mrb[0].mxu0
        %v2143 = vadd.f32 %v2075, %v2142
        %v2144 = vpop.f32.mrb[0].mxu0
        %v2145 = vpop.f32.mrb[0].mxu0
        %v2146 = vadd.f32 %v2075, %v2145
        %v2147 = vpop.f32.mrb[0].mxu0
        %2148 = vmatprep.mubr.bf16.mxu0 0
        %2149 = vmatmul.mubr.bf16.gmra.mrb[0].mxu0 %v2095
        %v2150 = vpop.f32.mrb[0].mxu0
        %v2151 = vadd.f32 %v2075, %v2150
        %v2152 = vpop.f32.mrb[0].mxu0
        %v2153 = vpop.f32.mrb[0].mxu0
        %v2154 = vadd.f32 %v2075, %v2153
        %v2155 = vpop.f32.mrb[0].mxu0
        %2156 = vmatprep.mubr.bf16.mxu0 0
        %2157 = vmatmul.mubr.bf16.gmra.mrb[0].mxu0 %v2098
        %v2158 = vpop.f32.mrb[0].mxu0
        %v2159 = vadd.f32 %v2075, %v2158
        %v2160 = vpop.f32.mrb[0].mxu0
        %v2161 = vpop.f32.mrb[0].mxu0
        %v2162 = vadd.f32 %v2075, %v2161
        %v2163 = vpop.f32.mrb[0].mxu0
        %2164 = vdwg.mxu0
        %v2165 = vlaneseq
        %v2166 = vshrl.u32 %v2165, 7
        %v2167 = vcvt.s32.f32 %v2166
        %vm2168 = vcmp.lt.f32.partialorder %v2167, %v1521
        %vm2169 = vcmp.lt.f32.partialorder %v2167, %v1525
        %vm2170 = vcmp.lt.f32.partialorder %v2167, %v1529
        %vm2171 = vcmp.lt.f32.partialorder %v2167, %v1533
        %vm2172 = vcmp.lt.f32.partialorder %v2167, %v1537
        %vm2173 = vcmp.lt.f32.partialorder %v2167, %v1541
        %vm2174 = vcmp.lt.f32.partialorder %v2167, %v1545
        %vm2175 = vcmp.lt.f32.partialorder %v2167, %v1549
        %v2176 = vsel %vm2168, %v2135, 0.0
        %v2177 = vsel %vm2169, %v2138, 0.0
        %v2178 = vsel %vm2170, %v2143, 0.0
        %v2179 = vsel %vm2171, %v2146, 0.0
        %v2180 = vsel %vm2172, %v2151, 0.0
        %v2181 = vsel %vm2173, %v2154, 0.0
        %v2182 = vsel %vm2174, %v2159, 0.0
        %v2183 = vsel %vm2175, %v2162, 0.0
        %v2184 = vsel %vm1215, %v2176, 0.0
        %v2185 = vrot.slane %v2184, 4
        %v2186 = vadd.f32 %v2184, %v2185
        %v2187 = vrot.slane %v2186, 2
        %v2188 = vadd.f32 %v2186, %v2187
        %v2189 = vrot.slane %v2188, 1
        %v2190 = vadd.f32 %v2188, %v2189
        %v2191 = vsel %vm1215, %v2177, 0.0
        %v2192 = vrot.slane %v2191, 4
        %v2193 = vadd.f32 %v2191, %v2192
        %v2194 = vrot.slane %v2193, 2
        %v2195 = vadd.f32 %v2193, %v2194
        %v2196 = vrot.slane %v2195, 1
        %v2197 = vadd.f32 %v2195, %v2196
        %v2198 = vsel %vm1215, %v2178, 0.0
        %v2199 = vrot.slane %v2198, 4
        %v2200 = vadd.f32 %v2198, %v2199
        %v2201 = vrot.slane %v2200, 2
        %v2202 = vadd.f32 %v2200, %v2201
        %v2203 = vrot.slane %v2202, 1
        %v2204 = vadd.f32 %v2202, %v2203
        %v2205 = vsel %vm1215, %v2179, 0.0
        %v2206 = vrot.slane %v2205, 4
        %v2207 = vadd.f32 %v2205, %v2206
        %v2208 = vrot.slane %v2207, 2
        %v2209 = vadd.f32 %v2207, %v2208
        %v2210 = vrot.slane %v2209, 1
        %v2211 = vadd.f32 %v2209, %v2210
        %v2212 = vsel %vm1215, %v2180, 0.0
        %v2213 = vrot.slane %v2212, 4
        %v2214 = vadd.f32 %v2212, %v2213
        %v2215 = vrot.slane %v2214, 2
        %v2216 = vadd.f32 %v2214, %v2215
        %v2217 = vrot.slane %v2216, 1
        %v2218 = vadd.f32 %v2216, %v2217
        %v2219 = vsel %vm1215, %v2181, 0.0
        %v2220 = vrot.slane %v2219, 4
        %v2221 = vadd.f32 %v2219, %v2220
        %v2222 = vrot.slane %v2221, 2
        %v2223 = vadd.f32 %v2221, %v2222
        %v2224 = vrot.slane %v2223, 1
        %v2225 = vadd.f32 %v2223, %v2224
        %v2226 = vsel %vm1215, %v2182, 0.0
        %v2227 = vrot.slane %v2226, 4
        %v2228 = vadd.f32 %v2226, %v2227
        %v2229 = vrot.slane %v2228, 2
        %v2230 = vadd.f32 %v2228, %v2229
        %v2231 = vrot.slane %v2230, 1
        %v2232 = vadd.f32 %v2230, %v2231
        %v2233 = vsel %vm1215, %v2183, 0.0
        %v2234 = vrot.slane %v2233, 4
        %v2235 = vadd.f32 %v2233, %v2234
        %v2236 = vrot.slane %v2235, 2
        %v2237 = vadd.f32 %v2235, %v2236
        %v2238 = vrot.slane %v2237, 1
        %v2239 = vadd.f32 %v2237, %v2238
        %v2240 = vadd.f32 %v359, 1e-09
        %2242 = vset.pattern.permute.xlu0 0
        %2243 = vperm.xlu0 %2242, %v2240
        %v2244 = vpop.permute.xlu0 %2243
        %v2245 = vrot.slane %v2244, 1
        %v2246 = vrot.slane %v2244, 2
        %v2247 = vrot.slane %v2244, 3
        %v2248 = vrot.slane %v2244, 4
        %v2249 = vrot.slane %v2244, 5
        %v2250 = vrot.slane %v2244, 6
        %v2251 = vrot.slane %v2244, 7
        %v2260 = vrcp.pop %v2244
        %v2261 = vmul.f32 %v2190, %v2260
        %v2262 = vrcp.pop %v2245
        %v2263 = vmul.f32 %v2197, %v2262
        %v2264 = vrcp.pop %v2246
        %v2265 = vmul.f32 %v2204, %v2264
        %v2266 = vrcp.pop %v2247
        %v2267 = vmul.f32 %v2211, %v2266
        %v2268 = vrcp.pop %v2248
        %v2269 = vmul.f32 %v2218, %v2268
        %v2270 = vrcp.pop %v2249
        %v2271 = vmul.f32 %v2225, %v2270
        %v2272 = vrcp.pop %v2250
        %v2273 = vmul.f32 %v2232, %v2272
        %v2274 = vrcp.pop %v2251
        %v2275 = vmul.f32 %v2239, %v2274
        %v2276 = vpack.c.bf16 %v2261, %v2261
        %v2277 = vpack.c.bf16 %v2263, %v2263
        %v2278 = vpack.c.bf16 %v2265, %v2265
        %v2279 = vpack.c.bf16 %v2267, %v2267
        %v2280 = vpack.c.bf16 %v2269, %v2269
        %v2281 = vpack.c.bf16 %v2271, %v2271
        %v2282 = vpack.c.bf16 %v2273, %v2273
        %v2283 = vpack.c.bf16 %v2275, %v2275
        %v2292 = vunpack.c.l.b16 %v2276
        %v2293 = vunpack.c.l.b16 %v2277
        %v2294 = vunpack.c.l.b16 %v2278
        %v2295 = vunpack.c.l.b16 %v2279
        %v2296 = vunpack.c.l.b16 %v2280
        %v2297 = vunpack.c.l.b16 %v2281
        %v2298 = vunpack.c.l.b16 %v2282
        %v2299 = vunpack.c.l.b16 %v2283
        %v2300 = vrot.slane %v2293, 7
        %vm2301 = vcmask 1041409
        %v2302 = vsel %vm2301, %v2300, %v2292
        %v2303 = vrot.slane %v2294, 6
        %vm2304 = vcmask 1042434
        %v2305 = vsel %vm2304, %v2303, %v2302
        %v2306 = vrot.slane %v2295, 5
        %vm2307 = vcmask 1043459
        %v2308 = vsel %vm2307, %v2306, %v2305
        %v2309 = vrot.slane %v2296, 4
        %vm2310 = vcmask 1044484
        %v2311 = vsel %vm2310, %v2309, %v2308
        %v2312 = vrot.slane %v2297, 3
        %vm2313 = vcmask 1045509
        %v2314 = vsel %vm2313, %v2312, %v2311
        %v2315 = vrot.slane %v2298, 2
        %vm2316 = vcmask 1046534
        %v2317 = vsel %vm2316, %v2315, %v2314
        %v2318 = vrot.slane %v2299, 1
        %vm2319 = vcmask 1047559
        %v2320 = vsel %vm2319, %v2318, %v2317
        %v2321 = vpack.c.b16 %v2320, %v2320
        %2322 = vrot.lane.b32.xlu0 %v2084, 96
        %v2323 = vpop.permute.xlu0 %2322
        %2324 = vrot.lane.b32.xlu0 %v2085, 96
        %v2325 = vpop.permute.xlu0 %2324
        %2329 = vrot.lane.b32.xlu0 %v2075, 96
        %v2330 = vpop.permute.xlu0 %2329
        %v2333 = vsel %vm1215, %v2321, 0
        %2335 = vmatprep.subr.bf16.mxu0 0
        %2336 = vmatpush1.bf16.msra.mxu0 %v2323
        %2337 = vmatprep.subr.bf16.mxu0 0
        %2338 = vmatpush1.bf16.msra.mxu0 %v2325
        %2339 = vmatprep.subr.bf16.mxu0 0
        %2340 = vmatpush1.bf16.msra.mxu0 0
        %2341 = vmatprep.subr.bf16.mxu0 0
        %2342 = vmatpush1.bf16.msra.mxu0 0
        %2343 = vmatprep.subr.bf16.mxu0 0
        %2344 = vmatpush1.bf16.msra.mxu0 0
        %2345 = vmatprep.subr.bf16.mxu0 0
        %2346 = vmatpush1.bf16.msra.mxu0 0
        %2347 = vmatprep.subr.bf16.mxu0 0
        %2348 = vmatpush1.bf16.msra.mxu0 0
        %2349 = vmatprep.subr.bf16.mxu0 0
        %2350 = vmatpush1.bf16.msra.mxu0 0
        %2351 = vmatprep.subr.bf16.mxu0 0
        %2352 = vmatpush1.bf16.msra.mxu0 0
        %2353 = vmatprep.subr.bf16.mxu0 0
        %2354 = vmatpush1.bf16.msra.mxu0 0
        %2355 = vmatprep.subr.bf16.mxu0 0
        %2356 = vmatpush1.bf16.msra.mxu0 0
        %2357 = vmatprep.subr.bf16.mxu0 0
        %2358 = vmatpush1.bf16.msra.mxu0 0
        %2359 = vmatprep.subr.bf16.mxu0 0
        %2360 = vmatpush1.bf16.msra.mxu0 0
        %2361 = vmatprep.subr.bf16.mxu0 0
        %2362 = vmatpush1.bf16.msra.mxu0 0
        %2363 = vmatprep.subr.bf16.mxu0 0
        %2364 = vmatpush1.bf16.msra.mxu0 0
        %2365 = vmatprep.subr.bf16.mxu0 0
        %2366 = vmatpush1.bf16.msra.mxu0 0
        %2367 = vmatprep.mubr.bf16.mxu0 0
        %2368 = vmatmul.mubr.bf16.gmra.mrb[0].mxu0 %v2333
        %v2369 = vpop.f32.mrb[0].mxu0
        %v2370 = vadd.f32 %v2330, %v2369
        %v2371 = vpop.f32.mrb[0].mxu0
        %v2372 = vpop.f32.mrb[0].mxu0
        %v2373 = vpop.f32.mrb[0].mxu0
        %2374 = vdwg.mxu0
        %v2375 = vmax.f32 %v2370, 0.0
        %v2376 = vpack.c.bf16 %v2375, %v2375
        %v2377 = vld [vmem:[%s4 + $0x30] sm:$0xf]
        %v2378 = vld [vmem:[%s4 + $0x3c] sm:$0xf]
        %v2379 = vld [vmem:[%s4 + $0x48] sm:$0xf]
        %v2380 = vld [vmem:[%s4 + $0x54] sm:$0xf]
        %v2381 = vld [vmem:[%s4 + $0x60] sm:$0xf]
        %v2382 = vld [vmem:[%s4 + $0x6c] sm:$0xf]
        %v2383 = vld [vmem:[%s4 + $0x78] sm:$0xf]
        %v2384 = vld [vmem:[%s4 + $0x84] sm:$0xf]
        %v2393 = vunpack.c.l.b16 %v2377
        %v2394 = vunpack.c.l.b16 %v2378
        %v2395 = vunpack.c.l.b16 %v2379
        %v2396 = vunpack.c.l.b16 %v2380
        %v2397 = vunpack.c.l.b16 %v2381
        %v2398 = vunpack.c.l.b16 %v2382
        %v2399 = vunpack.c.l.b16 %v2383
        %v2400 = vunpack.c.l.b16 %v2384
        %v2401 = vpack.c.b16 %v2394, %v2393
        %v2402 = vpack.c.b16 %v2396, %v2395
        %v2403 = vpack.c.b16 %v2398, %v2397
        %v2404 = vpack.c.b16 %v2400, %v2399
        %2409 = vrot.lane.b32.xlu0 %v2075, 32
        %v2410 = vpop.permute.xlu0 %2409
        %vm2412 = vcmask 523264
        %v2414 = vsel %vm2412, %v2376, 0
        %2416 = vmatprep.subr.bf16.mxu0 0
        %2417 = vmatpush1.bf16.msra.mxu0 %v2401
        %2418 = vmatprep.subr.bf16.mxu0 0
        %2419 = vmatpush1.bf16.msra.mxu0 %v2402
        %2420 = vmatprep.subr.bf16.mxu0 0
        %2421 = vmatpush1.bf16.msra.mxu0 %v2403
        %2422 = vmatprep.subr.bf16.mxu0 0
        %2423 = vmatpush1.bf16.msra.mxu0 %v2404
        %2424 = vmatprep.subr.bf16.mxu0 0
        %2425 = vmatpush1.bf16.msra.mxu0 0
        %2426 = vmatprep.subr.bf16.mxu0 0
        %2427 = vmatpush1.bf16.msra.mxu0 0
        %2428 = vmatprep.subr.bf16.mxu0 0
        %2429 = vmatpush1.bf16.msra.mxu0 0
        %2430 = vmatprep.subr.bf16.mxu0 0
        %2431 = vmatpush1.bf16.msra.mxu0 0
        %2432 = vmatprep.subr.bf16.mxu0 0
        %2433 = vmatpush1.bf16.msra.mxu0 0
        %2434 = vmatprep.subr.bf16.mxu0 0
        %2435 = vmatpush1.bf16.msra.mxu0 0
        %2436 = vmatprep.subr.bf16.mxu0 0
        %2437 = vmatpush1.bf16.msra.mxu0 0
        %2438 = vmatprep.subr.bf16.mxu0 0
        %2439 = vmatpush1.bf16.msra.mxu0 0
        %2440 = vmatprep.subr.bf16.mxu0 0
        %2441 = vmatpush1.bf16.msra.mxu0 0
        %2442 = vmatprep.subr.bf16.mxu0 0
        %2443 = vmatpush1.bf16.msra.mxu0 0
        %2444 = vmatprep.subr.bf16.mxu0 0
        %2445 = vmatpush1.bf16.msra.mxu0 0
        %2446 = vmatprep.subr.bf16.mxu0 0
        %2447 = vmatpush1.bf16.msra.mxu0 0
        %2448 = vmatprep.mubr.bf16.mxu0 0
        %2449 = vmatmul.mubr.bf16.gmra.mrb[0].mxu0 %v2414
        %v2450 = vpop.f32.mrb[0].mxu0
        %v2451 = vadd.f32 %v2410, %v2450
        %v2452 = vpop.f32.mrb[0].mxu0
        %v2453 = vpop.f32.mrb[0].mxu0
        %v2454 = vpop.f32.mrb[0].mxu0
        %2455 = vdwg.mxu0
        %v2457 = vrot.slane %v2451, 1
        %v2458 = vrot.slane %v2451, 2
        %v2459 = vrot.slane %v2451, 3
        %v2460 = vrot.slane %v2451, 4
        %v2461 = vrot.slane %v2451, 5
        %v2462 = vrot.slane %v2451, 6
        %v2463 = vrot.slane %v2451, 7
        %v2472 = vadd.f32 %v2261, %v2451
        %v2473 = vadd.f32 %v2263, %v2457
        %v2474 = vadd.f32 %v2265, %v2458
        %v2475 = vadd.f32 %v2267, %v2459
        %v2476 = vadd.f32 %v2269, %v2460
        %v2477 = vadd.f32 %v2271, %v2461
        %v2478 = vadd.f32 %v2273, %v2462
        %v2479 = vadd.f32 %v2275, %v2463
        %v2488 = vrot.slane %v2473, 7
        %v2489 = vsel %vm2301, %v2488, %v2472
        %v2490 = vrot.slane %v2474, 6
        %v2491 = vsel %vm2304, %v2490, %v2489
        %v2492 = vrot.slane %v2475, 5
        %v2493 = vsel %vm2307, %v2492, %v2491
        %v2494 = vrot.slane %v2476, 4
        %v2495 = vsel %vm2310, %v2494, %v2493
        %v2496 = vrot.slane %v2477, 3
        %v2497 = vsel %vm2313, %v2496, %v2495
        %v2498 = vrot.slane %v2478, 2
        %v2499 = vsel %vm2316, %v2498, %v2497
        %v2500 = vrot.slane %v2479, 1
        %v2501 = vsel %vm2319, %v2500, %v2499
        %v2503 = vsel %vm1215, %v2501, 0.0
        %2504 = vadd.xlane.f32.xlu0 %v2503
        %v2505 = vpop.xlane.xlu0 %2504
        %v2506 = vrcp.pop 32.0
        %v2507 = vmul.f32 %v2505, %v2506
        %v2509 = vrot.slane %v2507, 1
        %v2510 = vrot.slane %v2507, 2
        %v2511 = vrot.slane %v2507, 3
        %v2512 = vrot.slane %v2507, 4
        %v2513 = vrot.slane %v2507, 5
        %v2514 = vrot.slane %v2507, 6
        %v2515 = vrot.slane %v2507, 7
        %v2524 = vsub.f32 %v2472, %v2507
        %v2525 = vsub.f32 %v2473, %v2509
        %v2526 = vsub.f32 %v2474, %v2510
        %v2527 = vsub.f32 %v2475, %v2511
        %v2528 = vsub.f32 %v2476, %v2512
        %v2529 = vsub.f32 %v2477, %v2513
        %v2530 = vsub.f32 %v2478, %v2514
        %v2531 = vsub.f32 %v2479, %v2515
        %v2532 = vmul.f32 %v2524, %v2524
        %v2533 = vmul.f32 %v2525, %v2525
        %v2534 = vmul.f32 %v2526, %v2526
        %v2535 = vmul.f32 %v2527, %v2527
        %v2536 = vmul.f32 %v2528, %v2528
        %v2537 = vmul.f32 %v2529, %v2529
        %v2538 = vmul.f32 %v2530, %v2530
        %v2539 = vmul.f32 %v2531, %v2531
        %v2548 = vrot.slane %v2533, 7
        %v2549 = vsel %vm2301, %v2548, %v2532
        %v2550 = vrot.slane %v2534, 6
        %v2551 = vsel %vm2304, %v2550, %v2549
        %v2552 = vrot.slane %v2535, 5
        %v2553 = vsel %vm2307, %v2552, %v2551
        %v2554 = vrot.slane %v2536, 4
        %v2555 = vsel %vm2310, %v2554, %v2553
        %v2556 = vrot.slane %v2537, 3
        %v2557 = vsel %vm2313, %v2556, %v2555
        %v2558 = vrot.slane %v2538, 2
        %v2559 = vsel %vm2316, %v2558, %v2557
        %v2560 = vrot.slane %v2539, 1
        %v2561 = vsel %vm2319, %v2560, %v2559
        %v2563 = vsel %vm1215, %v2561, 0.0
        %2564 = vadd.xlane.f32.xlu0 %v2563
        %v2565 = vpop.xlane.xlu0 %2564
        %v2566 = vmul.f32 %v2565, %v2506
        %v2567 = vadd.f32 %v2566, 1e-05
        %v2568 = vrsqrt.pop %v2567
        %v2570 = vrot.slane %v2568, 1
        %v2571 = vrot.slane %v2568, 2
        %v2572 = vrot.slane %v2568, 3
        %v2573 = vrot.slane %v2568, 4
        %v2574 = vrot.slane %v2568, 5
        %v2575 = vrot.slane %v2568, 6
        %v2576 = vrot.slane %v2568, 7
        %v2585 = vmul.f32 %v2524, %v2568
        %v2586 = vmul.f32 %v2525, %v2570
        %v2587 = vmul.f32 %v2526, %v2571
        %v2588 = vmul.f32 %v2527, %v2572
        %v2589 = vmul.f32 %v2528, %v2573
        %v2590 = vmul.f32 %v2529, %v2574
        %v2591 = vmul.f32 %v2530, %v2575
        %v2592 = vmul.f32 %v2531, %v2576
        %v2593 = vmul.f32 %v2585, %v1518
        %v2594 = vmul.f32 %v2586, %v1518
        %v2595 = vmul.f32 %v2587, %v1518
        %v2596 = vmul.f32 %v2588, %v1518
        %v2597 = vmul.f32 %v2589, %v1518
        %v2598 = vmul.f32 %v2590, %v1518
        %v2599 = vmul.f32 %v2591, %v1518
        %v2600 = vmul.f32 %v2592, %v1518
        %2602 = vrot.lane.b32.xlu0 %v1518, 96
        %v2603 = vpop.permute.xlu0 %2602
        %v2605 = vadd.f32 %v2593, %v2603
        %v2606 = vadd.f32 %v2594, %v2603
        %v2607 = vadd.f32 %v2595, %v2603
        %v2608 = vadd.f32 %v2596, %v2603
        %v2609 = vadd.f32 %v2597, %v2603
        %v2610 = vadd.f32 %v2598, %v2603
        %v2611 = vadd.f32 %v2599, %v2603
        %v2612 = vadd.f32 %v2600, %v2603
        %v2621 = vrot.slane %v2606, 7
        %v2622 = vsel %vm2301, %v2621, %v2605
        %v2623 = vrot.slane %v2607, 6
        %v2624 = vsel %vm2304, %v2623, %v2622
        %v2625 = vrot.slane %v2608, 5
        %v2626 = vsel %vm2307, %v2625, %v2624
        %v2627 = vrot.slane %v2609, 4
        %v2628 = vsel %vm2310, %v2627, %v2626
        %v2629 = vrot.slane %v2610, 3
        %v2630 = vsel %vm2313, %v2629, %v2628
        %v2631 = vrot.slane %v2611, 2
        %v2632 = vsel %vm2316, %v2631, %v2630
        %v2633 = vrot.slane %v2612, 1
        %v2634 = vsel %vm2319, %v2633, %v2632
        %2636 = vst.msk [vmem:[%s342] sm:$0xff] %vm1215, %v2634
        %s2637 = sand.u32 %s193, 1
        %s2638 = scalar_lea.sflag [#allocation4], %s2637
        %s2639 = sand.u32 %s193, 1
        %s2640 = smul.addr %s2639, 8
        %s2641 = scalar_lea.vmem [#allocation8], %s2640
        // Predicated region
        $region61: #{tpu_custom_call.1} parent=47 // pred_check
          %p2642 = pneg %p203
        $region62: #{tpu_custom_call.1} parent=47 // pred_check_branch
          %2644 = sbr.rel (%p2642) target = $region64
        $region63: #{tpu_custom_call.1} parent=47 // pred_region
          %s2646 = ssub.s32 128, 128
          %2647 = vsyncadd %s2638, %s2646
          %s2648 = smul.addr %s23, 128
          %s2649 = scalar_lea.hbm %s7, %s2648
          %s2651 = sshll.u32 %s2641, 4
          %s2652 = int_to_ptr.vmem [resolvable:$true] %s2651
          %2654 = dma.vmem_to_hbm [thread:$0]  %s2652, 128, %s2649, %s2638
        $region64: #{tpu_custom_call.1} parent=47 // pred_fallthru
          _
      $region48: #{tpu_custom_call.1} parent=5 // pred_fallthru
        _
      %p2655 = scmp.le.s32.totalorder 2, %s18
      // Predicated region
      $region65: #{tpu_custom_call.1} parent=5 // pred_check
        %p2656 = pneg %p2655
      $region66: #{tpu_custom_call.1} parent=5 // pred_check_branch
        %2658 = sbr.rel (%p2656) target = $region68
      $region67: #{tpu_custom_call.1} parent=5 // pred_region
        %s2659 = ssub.s32 %s18, 2
        // Predicated region
        $region69: #{tpu_custom_call.1} parent=67 // pred_check
          %p2660 = pneg %p209
        $region70: #{tpu_custom_call.1} parent=67 // pred_check_branch
          %2662 = sbr.rel (%p2660) target = $region72
        $region71: #{tpu_custom_call.1} parent=67 // pred_region
          %s2663 = sand.u32 %s194, 1
          %s2664 = scalar_lea.sflag [#allocation4], %s2663
          %s2665 = sand.u32 %s194, 1
          %s2666 = smul.addr %s2665, 8
          %s2667 = scalar_lea.vmem [#allocation8], %s2666
          %2668 = dma.done %s2664, 128
        $region72: #{tpu_custom_call.1} parent=67 // pred_fallthru
          _
      $region68: #{tpu_custom_call.1} parent=5 // pred_fallthru
        _
    $region6: #{tpu_custom_call.1} parent=1 // loop_footer
      %s22 = sadd.s32 1, %s18
    $region7: #{tpu_custom_call.1} parent=1 // loop_footer_branch
      %17 = sbr.rel target = $region3
    $region8: #{tpu_custom_call.1} parent=1 // loop_exit
      _
    %2669 = vsyncpa [#allocation3], 1
    %s2670 = scalar_lea.sflag [#allocation3], 1
    %2671 = vsyncpa %s2670, 1
    %2672 = vsyncpa [#allocation6], 1
    %2673 = vsyncpa [#allocation4], 1
    %s2674 = scalar_lea.sflag [#allocation4], 1
    %2675 = vsyncpa %s2674, 1

</llo_original>
